<compile_context>
chip_gen: v7x
topology: tpu7x:2x2x1
jax: 0.10.0
libtpu: 0.0.40
codegen_flags: <defaults>
</compile_context>

<pallas_src>
import jax
import jax.numpy as jnp
from jax.experimental import pallas as pl
from jax.experimental.pallas import tpu as pltpu


def _conv_bn_relu(h, w_flat, shift):
    """One fused layer on a (T, Cin) channels-last tile (one batch element).

    h:      (T, Cin)        f32 activations
    w_flat: (K*Cin, Cout)   conv weight, BN scale already folded in
    shift:  (1, Cout)       (conv_bias - running_mean) * scale + beta
    """
    T, Cin = h.shape
    KC, Cout = w_flat.shape
    K = KC // Cin
    P = K // 2                      # == int(kernel_size / 2) in the module
    pad = jnp.zeros((P, Cin), jnp.float32)
    h_pad = jnp.concatenate([pad, h, pad], axis=0)          # (T + 2P, Cin)
    # im2col: slab[t, k*Cin + c] = h_pad[t + k, c]  ->  one deep MXU matmul
    slab = jnp.concatenate([h_pad[k:k + T, :] for k in range(K)], axis=1)
    y = jnp.dot(slab, w_flat, preferred_element_type=jnp.float32)
    return jnp.maximum(y + shift, 0.0)


def fcn_fused_kernel(x_ref, w1_ref, s1_ref, w2_ref, s2_ref, w3_ref, s3_ref,
                     o_ref):
    # x_ref: (1, T, C0)  one batch element, channels-last
    # wN_ref: (K_N * C_{N-1}, C_N) folded conv weights; sN_ref: (1, C_N) shift
    # o_ref: (1, T, C3)
    h = x_ref[0]                                            # (T, C0)
    h = _conv_bn_relu(h, w1_ref[...], s1_ref[...])
    h = _conv_bn_relu(h, w2_ref[...], s2_ref[...])
    h = _conv_bn_relu(h, w3_ref[...], s3_ref[...])
    o_ref[0] = h.astype(o_ref.dtype)


def fcn_forward(x_nct, params):
    """x_nct: (N, C, T) like the PyTorch module's forward input.

    Returns the PyTorch-layout output (N, C_out, 1, T).
    """
    N, C0, T = x_nct.shape
    x = jnp.transpose(x_nct, (0, 2, 1))                     # (N, T, C0)
    (w1, s1), (w2, s2), (w3, s3) = params
    Cout = w3.shape[1]

    out = pl.pallas_call(
        fcn_fused_kernel,
        out_shape=jax.ShapeDtypeStruct((N, T, Cout), jnp.float32),
        grid=(N,),
        in_specs=[
            pl.BlockSpec((1, T, C0), lambda n: (n, 0, 0)),
            pl.BlockSpec(w1.shape, lambda n: (0, 0)),
            pl.BlockSpec(s1.shape, lambda n: (0, 0)),
            pl.BlockSpec(w2.shape, lambda n: (0, 0)),
            pl.BlockSpec(s2.shape, lambda n: (0, 0)),
            pl.BlockSpec(w3.shape, lambda n: (0, 0)),
            pl.BlockSpec(s3.shape, lambda n: (0, 0)),
        ],
        out_specs=pl.BlockSpec((1, T, Cout), lambda n: (n, 0, 0)),
        compiler_params=pltpu.CompilerParams(
            dimension_semantics=("parallel",)),
    )(x, w1, s1, w2, s2, w3, s3)

    return jnp.transpose(out, (0, 2, 1))[:, :, None, :]     # (N, Cout, 1, T)


def init_fcn_params(key, input_size, hidden_sizes, kernel_sizes):
    """Deterministic synthetic params; BN scale folded into weights at prep time."""
    params = []
    cin = input_size
    eps = 1e-5
    for h, k in zip(hidden_sizes, kernel_sizes):
        key, kw, kb, kg, kbt, km, kv = jax.random.split(key, 7)
        w = jax.random.normal(kw, (k, cin, h), jnp.float32) / jnp.sqrt(k * cin)
        b = 0.01 * jax.random.normal(kb, (h,), jnp.float32)
        gamma = 1.0 + 0.1 * jax.random.normal(kg, (h,), jnp.float32)
        beta = 0.1 * jax.random.normal(kbt, (h,), jnp.float32)
        rmean = 0.1 * jax.random.normal(km, (h,), jnp.float32)
        rvar = jnp.abs(1.0 + 0.1 * jax.random.normal(kv, (h,), jnp.float32))
        s = gamma / jnp.sqrt(rvar + eps)
        w_folded = (w * s[None, None, :]).reshape(k * cin, h)   # fold BN scale
        shift = ((b - rmean) * s + beta).reshape(1, h)
        params.append((w_folded, shift))
        cin = h
    return params


def _ref_forward(x_nct, params, kernel_sizes, input_size):
    """Pure-JAX reference (shifted einsums, independent of the im2col path)."""
    h = jnp.transpose(x_nct, (0, 2, 1))                     # (N, T, C)
    cin = input_size
    for (w_flat, shift), k in zip(params, kernel_sizes):
        cout = w_flat.shape[1]
        w = w_flat.reshape(k, cin, cout)
        p = k // 2
        T = h.shape[1]
        hp = jnp.pad(h, ((0, 0), (p, p), (0, 0)))
        acc = jnp.zeros((h.shape[0], T, cout), jnp.float32)
        for kk in range(k):
            acc = acc + jnp.einsum("ntc,cd->ntd", hp[:, kk:kk + T, :], w[kk])
        h = jnp.maximum(acc + shift, 0.0)
        cin = cout
    return jnp.transpose(h, (0, 2, 1))[:, :, None, :]


if __name__ == "__main__":
    # module config (num_classes/num_segments do not affect forward)
    input_size = 16
    hidden_sizes = [128, 256, 256]
    kernel_sizes = [9, 5, 3]
    N, T = 2, 16

    key = jax.random.PRNGKey(0)
    kx, kp = jax.random.split(key)
    x = jax.random.normal(kx, (N, input_size, T), jnp.float32)
    params = init_fcn_params(kp, input_size, hidden_sizes, kernel_sizes)

    fwd = jax.jit(fcn_forward)
    out = jax.block_until_ready(fwd(x, params))

    ref = _ref_forward(x, params, kernel_sizes, input_size)
    assert out.shape == (N, hidden_sizes[-1], 1, T), out.shape
    assert jnp.allclose(out, ref, atol=1e-4, rtol=1e-4), "mismatch vs JAX reference"
    print("KERNEL_OK")
</pallas_src>

<mosaic_0001>
module attributes {stable_mosaic.version = 11 : i64} {
  func.func @fcn_fused_kernel(%arg0: i32, %arg1: memref<1x16x16xf32, #tpu.memory_space<vmem>>, %arg2: memref<144x128xf32, #tpu.memory_space<vmem>>, %arg3: memref<1x128xf32, #tpu.memory_space<vmem>>, %arg4: memref<640x256xf32, #tpu.memory_space<vmem>>, %arg5: memref<1x256xf32, #tpu.memory_space<vmem>>, %arg6: memref<768x256xf32, #tpu.memory_space<vmem>>, %arg7: memref<1x256xf32, #tpu.memory_space<vmem>>, %arg8: memref<1x16x256xf32, #tpu.memory_space<vmem>>) attributes {dimension_semantics = [#tpu.dimension_semantics<parallel>], iteration_bounds = array<i64: 2>, scalar_prefetch = 0 : i64, scratch_operands = 0 : i64, tpu.core_type = #tpu.core_type<tc>, window_params = [{transform_indices = @transform_0, window_bounds = array<i64: 1, 16, 16>}, {pipeline_mode = #tpu.pipeline_mode<synchronous>, transform_indices = @transform_1, window_bounds = array<i64: 144, 128>}, {pipeline_mode = #tpu.pipeline_mode<synchronous>, transform_indices = @transform_2, window_bounds = array<i64: 1, 128>}, {pipeline_mode = #tpu.pipeline_mode<synchronous>, transform_indices = @transform_3, window_bounds = array<i64: 640, 256>}, {pipeline_mode = #tpu.pipeline_mode<synchronous>, transform_indices = @transform_4, window_bounds = array<i64: 1, 256>}, {pipeline_mode = #tpu.pipeline_mode<synchronous>, transform_indices = @transform_5, window_bounds = array<i64: 768, 256>}, {pipeline_mode = #tpu.pipeline_mode<synchronous>, transform_indices = @transform_6, window_bounds = array<i64: 1, 256>}, {transform_indices = @transform_7, window_bounds = array<i64: 1, 16, 256>}]} {
    %c0 = arith.constant 0 : index
    %c0_0 = arith.constant 0 : index
    %c0_1 = arith.constant 0 : index
    %0 = vector.load %arg1[%c0, %c0_0, %c0_1] : memref<1x16x16xf32, #tpu.memory_space<vmem>>, vector<1x16x16xf32>
    %1 = vector.shape_cast %0 : vector<1x16x16xf32> to vector<16x16xf32>
    %c0_2 = arith.constant 0 : index
    %c0_3 = arith.constant 0 : index
    %2 = vector.load %arg2[%c0_2, %c0_3] : memref<144x128xf32, #tpu.memory_space<vmem>>, vector<144x128xf32>
    %c0_4 = arith.constant 0 : index
    %c0_5 = arith.constant 0 : index
    %3 = vector.load %arg3[%c0_4, %c0_5] : memref<1x128xf32, #tpu.memory_space<vmem>>, vector<1x128xf32>
    %cst = arith.constant 0.000000e+00 : f32
    %4 = vector.broadcast %cst : f32 to vector<4x16xf32>
    %5 = tpu.concatenate %4, %1, %4 in 0 : vector<4x16xf32>, vector<16x16xf32>, vector<4x16xf32> -> vector<24x16xf32>
    %6 = vector.extract_strided_slice %5 {offsets = [0, 0], sizes = [16, 16], strides = [1, 1]} : vector<24x16xf32> to vector<16x16xf32>
    %7 = vector.extract_strided_slice %5 {offsets = [1, 0], sizes = [16, 16], strides = [1, 1]} : vector<24x16xf32> to vector<16x16xf32>
    %8 = vector.extract_strided_slice %5 {offsets = [2, 0], sizes = [16, 16], strides = [1, 1]} : vector<24x16xf32> to vector<16x16xf32>
    %9 = vector.extract_strided_slice %5 {offsets = [3, 0], sizes = [16, 16], strides = [1, 1]} : vector<24x16xf32> to vector<16x16xf32>
    %10 = vector.extract_strided_slice %5 {offsets = [4, 0], sizes = [16, 16], strides = [1, 1]} : vector<24x16xf32> to vector<16x16xf32>
    %11 = vector.extract_strided_slice %5 {offsets = [5, 0], sizes = [16, 16], strides = [1, 1]} : vector<24x16xf32> to vector<16x16xf32>
    %12 = vector.extract_strided_slice %5 {offsets = [6, 0], sizes = [16, 16], strides = [1, 1]} : vector<24x16xf32> to vector<16x16xf32>
    %13 = vector.extract_strided_slice %5 {offsets = [7, 0], sizes = [16, 16], strides = [1, 1]} : vector<24x16xf32> to vector<16x16xf32>
    %14 = vector.extract_strided_slice %5 {offsets = [8, 0], sizes = [16, 16], strides = [1, 1]} : vector<24x16xf32> to vector<16x16xf32>
    %15 = tpu.concatenate %6, %7, %8, %9, %10, %11, %12, %13, %14 in 1 : vector<16x16xf32>, vector<16x16xf32>, vector<16x16xf32>, vector<16x16xf32>, vector<16x16xf32>, vector<16x16xf32>, vector<16x16xf32>, vector<16x16xf32>, vector<16x16xf32> -> vector<16x144xf32>
    %cst_6 = arith.constant dense<0.000000e+00> : vector<16x128xf32>
    %16 = tpu.matmul %15, %2, %cst_6 {dimension_numbers = #tpu.dot_dimension_numbers<[1], [0], [0], [1], [0, 0, 1, 1], [], []>} : vector<16x144xf32>, vector<144x128xf32>, vector<16x128xf32> -> vector<16x128xf32>
    %17 = vector.broadcast %3 : vector<1x128xf32> to vector<16x128xf32>
    %18 = arith.addf %16, %17 : vector<16x128xf32>
    %cst_7 = arith.constant 0.000000e+00 : f32
    %19 = vector.broadcast %cst_7 : f32 to vector<16x128xf32>
    %20 = arith.maximumf %18, %19 : vector<16x128xf32>
    %c0_8 = arith.constant 0 : index
    %c0_9 = arith.constant 0 : index
    %21 = vector.load %arg4[%c0_8, %c0_9] : memref<640x256xf32, #tpu.memory_space<vmem>>, vector<640x256xf32>
    %c0_10 = arith.constant 0 : index
    %c0_11 = arith.constant 0 : index
    %22 = vector.load %arg5[%c0_10, %c0_11] : memref<1x256xf32, #tpu.memory_space<vmem>>, vector<1x256xf32>
    %cst_12 = arith.constant 0.000000e+00 : f32
    %23 = vector.broadcast %cst_12 : f32 to vector<2x128xf32>
    %24 = tpu.concatenate %23, %20, %23 in 0 : vector<2x128xf32>, vector<16x128xf32>, vector<2x128xf32> -> vector<20x128xf32>
    %25 = vector.extract_strided_slice %24 {offsets = [0, 0], sizes = [16, 128], strides = [1, 1]} : vector<20x128xf32> to vector<16x128xf32>
    %26 = vector.extract_strided_slice %24 {offsets = [1, 0], sizes = [16, 128], strides = [1, 1]} : vector<20x128xf32> to vector<16x128xf32>
    %27 = vector.extract_strided_slice %24 {offsets = [2, 0], sizes = [16, 128], strides = [1, 1]} : vector<20x128xf32> to vector<16x128xf32>
    %28 = vector.extract_strided_slice %24 {offsets = [3, 0], sizes = [16, 128], strides = [1, 1]} : vector<20x128xf32> to vector<16x128xf32>
    %29 = vector.extract_strided_slice %24 {offsets = [4, 0], sizes = [16, 128], strides = [1, 1]} : vector<20x128xf32> to vector<16x128xf32>
    %30 = tpu.concatenate %25, %26, %27, %28, %29 in 1 : vector<16x128xf32>, vector<16x128xf32>, vector<16x128xf32>, vector<16x128xf32>, vector<16x128xf32> -> vector<16x640xf32>
    %cst_13 = arith.constant dense<0.000000e+00> : vector<16x256xf32>
    %31 = tpu.matmul %30, %21, %cst_13 {dimension_numbers = #tpu.dot_dimension_numbers<[1], [0], [0], [1], [0, 0, 1, 1], [], []>} : vector<16x640xf32>, vector<640x256xf32>, vector<16x256xf32> -> vector<16x256xf32>
    %32 = vector.broadcast %22 : vector<1x256xf32> to vector<16x256xf32>
    %33 = arith.addf %31, %32 : vector<16x256xf32>
    %cst_14 = arith.constant 0.000000e+00 : f32
    %34 = vector.broadcast %cst_14 : f32 to vector<16x256xf32>
    %35 = arith.maximumf %33, %34 : vector<16x256xf32>
    %c0_15 = arith.constant 0 : index
    %c0_16 = arith.constant 0 : index
    %36 = vector.load %arg6[%c0_15, %c0_16] : memref<768x256xf32, #tpu.memory_space<vmem>>, vector<768x256xf32>
    %c0_17 = arith.constant 0 : index
    %c0_18 = arith.constant 0 : index
    %37 = vector.load %arg7[%c0_17, %c0_18] : memref<1x256xf32, #tpu.memory_space<vmem>>, vector<1x256xf32>
    %cst_19 = arith.constant 0.000000e+00 : f32
    %38 = vector.broadcast %cst_19 : f32 to vector<1x256xf32>
    %39 = tpu.concatenate %38, %35, %38 in 0 : vector<1x256xf32>, vector<16x256xf32>, vector<1x256xf32> -> vector<18x256xf32>
    %40 = vector.extract_strided_slice %39 {offsets = [0, 0], sizes = [16, 256], strides = [1, 1]} : vector<18x256xf32> to vector<16x256xf32>
    %41 = vector.extract_strided_slice %39 {offsets = [1, 0], sizes = [16, 256], strides = [1, 1]} : vector<18x256xf32> to vector<16x256xf32>
    %42 = vector.extract_strided_slice %39 {offsets = [2, 0], sizes = [16, 256], strides = [1, 1]} : vector<18x256xf32> to vector<16x256xf32>
    %43 = tpu.concatenate %40, %41, %42 in 1 : vector<16x256xf32>, vector<16x256xf32>, vector<16x256xf32> -> vector<16x768xf32>
    %cst_20 = arith.constant dense<0.000000e+00> : vector<16x256xf32>
    %44 = tpu.matmul %43, %36, %cst_20 {dimension_numbers = #tpu.dot_dimension_numbers<[1], [0], [0], [1], [0, 0, 1, 1], [], []>} : vector<16x768xf32>, vector<768x256xf32>, vector<16x256xf32> -> vector<16x256xf32>
    %45 = vector.broadcast %37 : vector<1x256xf32> to vector<16x256xf32>
    %46 = arith.addf %44, %45 : vector<16x256xf32>
    %cst_21 = arith.constant 0.000000e+00 : f32
    %47 = vector.broadcast %cst_21 : f32 to vector<16x256xf32>
    %48 = arith.maximumf %46, %47 : vector<16x256xf32>
    %c0_22 = arith.constant 0 : index
    %c0_23 = arith.constant 0 : index
    %c0_24 = arith.constant 0 : index
    %49 = vector.load %arg8[%c0_22, %c0_23, %c0_24] : memref<1x16x256xf32, #tpu.memory_space<vmem>>, vector<1x16x256xf32>
    %50 = vector.shape_cast %49 : vector<1x16x256xf32> to vector<16x256xf32>
    %51 = vector.shape_cast %48 : vector<16x256xf32> to vector<1x16x256xf32>
    tpu.vector_store %arg8[%c0_22, %c0_23, %c0_24], %51 {strides = array<i32>} : memref<1x16x256xf32, #tpu.memory_space<vmem>>, vector<1x16x256xf32>,
    return
  }
  func.func @transform_0(%arg0: i32) -> (i32, i32, i32) {
    %c0_i32 = arith.constant 0 : i32
    %c0_i32_0 = arith.constant 0 : i32
    %c0_i32_1 = arith.constant 0 : i32
    return %arg0, %c0_i32, %c0_i32_0 : i32, i32, i32
  }
  func.func @transform_1(%arg0: i32) -> (i32, i32) {
    %c0_i32 = arith.constant 0 : i32
    %c0_i32_0 = arith.constant 0 : i32
    %c0_i32_1 = arith.constant 0 : i32
    return %c0_i32, %c0_i32_0 : i32, i32
  }
  func.func @transform_2(%arg0: i32) -> (i32, i32) {
    %c0_i32 = arith.constant 0 : i32
    %c0_i32_0 = arith.constant 0 : i32
    %c0_i32_1 = arith.constant 0 : i32
    return %c0_i32, %c0_i32_0 : i32, i32
  }
  func.func @transform_3(%arg0: i32) -> (i32, i32) {
    %c0_i32 = arith.constant 0 : i32
    %c0_i32_0 = arith.constant 0 : i32
    %c0_i32_1 = arith.constant 0 : i32
    return %c0_i32, %c0_i32_0 : i32, i32
  }
  func.func @transform_4(%arg0: i32) -> (i32, i32) {
    %c0_i32 = arith.constant 0 : i32
    %c0_i32_0 = arith.constant 0 : i32
    %c0_i32_1 = arith.constant 0 : i32
    return %c0_i32, %c0_i32_0 : i32, i32
  }
  func.func @transform_5(%arg0: i32) -> (i32, i32) {
    %c0_i32 = arith.constant 0 : i32
    %c0_i32_0 = arith.constant 0 : i32
    %c0_i32_1 = arith.constant 0 : i32
    return %c0_i32, %c0_i32_0 : i32, i32
  }
  func.func @transform_6(%arg0: i32) -> (i32, i32) {
    %c0_i32 = arith.constant 0 : i32
    %c0_i32_0 = arith.constant 0 : i32
    %c0_i32_1 = arith.constant 0 : i32
    return %c0_i32, %c0_i32_0 : i32, i32
  }
  func.func @transform_7(%arg0: i32) -> (i32, i32, i32) {
    %c0_i32 = arith.constant 0 : i32
    %c0_i32_0 = arith.constant 0 : i32
    %c0_i32_1 = arith.constant 0 : i32
    return %arg0, %c0_i32, %c0_i32_0 : i32, i32, i32
  }
}

</mosaic_0001>

<llo_original>
// kernel: fcn_forward.1
$region0: #{fcn_forward.1}
  #allocation0 [shape = 'u32[]', space=smem, size = 0x4, offset = 0x4, fixed_abs, tag = 'smem constant byte address 0x4 - core index']
  #allocation1 [shape = 'u32[144,128]{1,0:T(1,128)}', space=vmem, size = 0x12000, scoped, tag = 'internal scratch']
  %s0 = inlined_call_operand.vmem [shape: f32[2,16,16], index: 0, kind: input, shape index: {}]
  %s1 = inlined_call_operand.hbm [shape: f32[144,128], index: 1, kind: input, shape index: {}]
  %s2 = inlined_call_operand.vmem [shape: f32[1,128], index: 2, kind: input, shape index: {}]
  %s3 = inlined_call_operand.hbm [shape: f32[640,256], index: 3, kind: input, shape index: {}]
  %s4 = inlined_call_operand.vmem [shape: f32[1,256], index: 4, kind: input, shape index: {}]
  %s5 = inlined_call_operand.hbm [shape: f32[768,256], index: 5, kind: input, shape index: {}]
  %s6 = inlined_call_operand.vmem [shape: f32[1,256], index: 6, kind: input, shape index: {}]
  %s7 = inlined_call_operand.hbm [shape: f32[2,16,256], index: 7, kind: output, shape index: {}]
  %s8 = sld [smem:[#allocation0]]
  $region73: #{fcn_forward.1} parent=0
    _
  %s10 = ssub.s32 1, %s8
  %s11 = scalar_select 0, %s10, %s8
  $region1: #{fcn_forward.1} parent=0
    #allocation2 [shape = 'u8[73728]{0}', space=vmem, size = 0x12000, scoped, tag = 'input window, operand 1, single buffered']
    #allocation3 [shape = 's32[2]{0}', space=sflag, size = 0x8, scoped, tag = 'scoped memory for fcn_forward.1']
    #allocation4 [shape = 's32[2]{0}', space=sflag, size = 0x8, scoped, tag = 'scoped memory for fcn_forward.1']
    #allocation5 [shape = 'u8[655360]{0}', space=vmem, size = 0xa0000, scoped, tag = 'input window, operand 3, single buffered']
    #allocation6 [shape = 's32[1]{0}', space=sflag, size = 0x4, scoped, tag = 'scoped memory for fcn_forward.1']
    #allocation7 [shape = 'u8[786432]{0}', space=vmem, size = 0xc0000, scoped, tag = 'input window, operand 5, single buffered']
    #allocation8 [shape = 'u8[32768]{0}', space=vmem, size = 0x8000, scoped, tag = 'output window, operand 0']
    %12 = vsyncpa [#allocation3], 0
    %13 = vsyncpa [#allocation6], 0
    %14 = vsyncpa [#allocation4], 0
    %s15 = scalar_lea.sflag [#allocation4], 1
    %16 = vsyncpa %s15, 0
    loop: start=0, step=1, limit=4
    $region2: #{fcn_forward.1} parent=1 // loop_pre_header
      _
    $region3: #{fcn_forward.1} parent=1 // loop_header
      %s18 = sphi 0, %s22
      %p19 = scmp.ge.s32.totalorder %s18, 4
      %s28 = sphi 0, %s30
      %s31 = sphi 0, %s28
      %s32 = sphi 0, %s31
      %s48 = sphi 0, %s32
      %s52 = sphi 0, %s52
      %s54 = sphi 0, %s52
      %s55 = sphi 0, %s54
      %s69 = sphi 0, %s55
      %s73 = sphi 0, %s73
      %s75 = sphi 0, %s73
      %s76 = sphi 0, %s75
      %s90 = sphi 0, %s76
      %s94 = sphi 0, %s94
      %s96 = sphi 0, %s94
      %s97 = sphi 0, %s96
      %s111 = sphi 0, %s97
      %s115 = sphi 0, %s115
      %s117 = sphi 0, %s115
      %s118 = sphi 0, %s117
      %s132 = sphi 0, %s118
      %s136 = sphi 0, %s136
      %s138 = sphi 0, %s136
      %s139 = sphi 0, %s138
      %s153 = sphi 0, %s139
      %s157 = sphi 0, %s157
      %s159 = sphi 0, %s157
      %s160 = sphi 0, %s159
      %s174 = sphi 0, %s160
      %s180 = sphi 0, %s182
      %s183 = sphi 0, %s180
      %s184 = sphi 0, %s183
      %s200 = sphi 0, %s184
    $region4: #{fcn_forward.1} parent=1 // loop_header_branch
      %21 = sbr.rel (%p19) target = $region8
    $region5: #{fcn_forward.1} parent=1 // loop_body
      %s23 = ssub.s32 %s18, 1
      %s24 = ssub.s32 %s18, 2
      %s25 = sadd.s32 %s18, 1
      %s26 = ssub.s32 %s18, %s25
      %p27 = scmp.eq.s32.totalorder %s26, 0
      %s29 = sadd.s32 %s28, 1
      %s30 = scalar_select %p27, %s28, %s29
      %p33 = pneg %p27
      %p34 = scmp.eq.s32.totalorder %s18, 1
      %p35 = por %p33, %p34
      %p36 = scmp.ne.s32.totalorder %s28, %s31
      %p37 = scmp.eq.s32.totalorder %s18, 0
      %p38 = por %p36, %p37
      %p39 = scmp.ne.s32.totalorder %s28, %s31
      %p40 = scmp.eq.s32.totalorder %s23, 1
      %p41 = por %p39, %p40
      %p42 = scmp.ne.s32.totalorder %s31, %s32
      %p43 = scmp.eq.s32.totalorder %s23, 0
      %p44 = por %p42, %p43
      %p45 = scmp.ne.s32.totalorder %s31, %s32
      %p46 = scmp.eq.s32.totalorder %s24, 1
      %p47 = por %p45, %p46
      %p49 = scmp.ne.s32.totalorder %s32, %s48
      %p50 = scmp.eq.s32.totalorder %s24, 0
      %p51 = por %p49, %p50
      %s53 = sadd.s32 %s52, 1
      %p56 = scmp.eq.s32.totalorder %s18, 1
      %p57 = scmp.ne.s32.totalorder %s52, %s54
      %p58 = scmp.eq.s32.totalorder %s18, 0
      %p59 = por %p57, %p58
      %p60 = scmp.ne.s32.totalorder %s52, %s54
      %p61 = scmp.eq.s32.totalorder %s23, 1
      %p62 = por %p60, %p61
      %p63 = scmp.ne.s32.totalorder %s54, %s55
      %p64 = scmp.eq.s32.totalorder %s23, 0
      %p65 = por %p63, %p64
      %p66 = scmp.ne.s32.totalorder %s54, %s55
      %p67 = scmp.eq.s32.totalorder %s24, 1
      %p68 = por %p66, %p67
      %p70 = scmp.ne.s32.totalorder %s55, %s69
      %p71 = scmp.eq.s32.totalorder %s24, 0
      %p72 = por %p70, %p71
      %s74 = sadd.s32 %s73, 1
      %p77 = scmp.eq.s32.totalorder %s18, 1
      %p78 = scmp.ne.s32.totalorder %s73, %s75
      %p79 = scmp.eq.s32.totalorder %s18, 0
      %p80 = por %p78, %p79
      %p81 = scmp.ne.s32.totalorder %s73, %s75
      %p82 = scmp.eq.s32.totalorder %s23, 1
      %p83 = por %p81, %p82
      %p84 = scmp.ne.s32.totalorder %s75, %s76
      %p85 = scmp.eq.s32.totalorder %s23, 0
      %p86 = por %p84, %p85
      %p87 = scmp.ne.s32.totalorder %s75, %s76
      %p88 = scmp.eq.s32.totalorder %s24, 1
      %p89 = por %p87, %p88
      %p91 = scmp.ne.s32.totalorder %s76, %s90
      %p92 = scmp.eq.s32.totalorder %s24, 0
      %p93 = por %p91, %p92
      %s95 = sadd.s32 %s94, 1
      %p98 = scmp.eq.s32.totalorder %s18, 1
      %p99 = scmp.ne.s32.totalorder %s94, %s96
      %p100 = scmp.eq.s32.totalorder %s18, 0
      %p101 = por %p99, %p100
      %p102 = scmp.ne.s32.totalorder %s94, %s96
      %p103 = scmp.eq.s32.totalorder %s23, 1
      %p104 = por %p102, %p103
      %p105 = scmp.ne.s32.totalorder %s96, %s97
      %p106 = scmp.eq.s32.totalorder %s23, 0
      %p107 = por %p105, %p106
      %p108 = scmp.ne.s32.totalorder %s96, %s97
      %p109 = scmp.eq.s32.totalorder %s24, 1
      %p110 = por %p108, %p109
      %p112 = scmp.ne.s32.totalorder %s97, %s111
      %p113 = scmp.eq.s32.totalorder %s24, 0
      %p114 = por %p112, %p113
      %s116 = sadd.s32 %s115, 1
      %p119 = scmp.eq.s32.totalorder %s18, 1
      %p120 = scmp.ne.s32.totalorder %s115, %s117
      %p121 = scmp.eq.s32.totalorder %s18, 0
      %p122 = por %p120, %p121
      %p123 = scmp.ne.s32.totalorder %s115, %s117
      %p124 = scmp.eq.s32.totalorder %s23, 1
      %p125 = por %p123, %p124
      %p126 = scmp.ne.s32.totalorder %s117, %s118
      %p127 = scmp.eq.s32.totalorder %s23, 0
      %p128 = por %p126, %p127
      %p129 = scmp.ne.s32.totalorder %s117, %s118
      %p130 = scmp.eq.s32.totalorder %s24, 1
      %p131 = por %p129, %p130
      %p133 = scmp.ne.s32.totalorder %s118, %s132
      %p134 = scmp.eq.s32.totalorder %s24, 0
      %p135 = por %p133, %p134
      %s137 = sadd.s32 %s136, 1
      %p140 = scmp.eq.s32.totalorder %s18, 1
      %p141 = scmp.ne.s32.totalorder %s136, %s138
      %p142 = scmp.eq.s32.totalorder %s18, 0
      %p143 = por %p141, %p142
      %p144 = scmp.ne.s32.totalorder %s136, %s138
      %p145 = scmp.eq.s32.totalorder %s23, 1
      %p146 = por %p144, %p145
      %p147 = scmp.ne.s32.totalorder %s138, %s139
      %p148 = scmp.eq.s32.totalorder %s23, 0
      %p149 = por %p147, %p148
      %p150 = scmp.ne.s32.totalorder %s138, %s139
      %p151 = scmp.eq.s32.totalorder %s24, 1
      %p152 = por %p150, %p151
      %p154 = scmp.ne.s32.totalorder %s139, %s153
      %p155 = scmp.eq.s32.totalorder %s24, 0
      %p156 = por %p154, %p155
      %s158 = sadd.s32 %s157, 1
      %p161 = scmp.eq.s32.totalorder %s18, 1
      %p162 = scmp.ne.s32.totalorder %s157, %s159
      %p163 = scmp.eq.s32.totalorder %s18, 0
      %p164 = por %p162, %p163
      %p165 = scmp.ne.s32.totalorder %s157, %s159
      %p166 = scmp.eq.s32.totalorder %s23, 1
      %p167 = por %p165, %p166
      %p168 = scmp.ne.s32.totalorder %s159, %s160
      %p169 = scmp.eq.s32.totalorder %s23, 0
      %p170 = por %p168, %p169
      %p171 = scmp.ne.s32.totalorder %s159, %s160
      %p172 = scmp.eq.s32.totalorder %s24, 1
      %p173 = por %p171, %p172
      %p175 = scmp.ne.s32.totalorder %s160, %s174
      %p176 = scmp.eq.s32.totalorder %s24, 0
      %p177 = por %p175, %p176
      %s178 = ssub.s32 %s18, %s25
      %p179 = scmp.eq.s32.totalorder %s178, 0
      %s181 = sadd.s32 %s180, 1
      %s182 = scalar_select %p179, %s180, %s181
      %p185 = pneg %p179
      %p186 = scmp.eq.s32.totalorder %s18, 1
      %p187 = por %p185, %p186
      %p188 = scmp.ne.s32.totalorder %s180, %s183
      %p189 = scmp.eq.s32.totalorder %s18, 0
      %p190 = por %p188, %p189
      %p191 = scmp.ne.s32.totalorder %s180, %s183
      %p192 = scmp.eq.s32.totalorder %s23, 1
      %p193 = por %p191, %p192
      %p194 = scmp.ne.s32.totalorder %s183, %s184
      %p195 = scmp.eq.s32.totalorder %s23, 0
      %p196 = por %p194, %p195
      %p197 = scmp.ne.s32.totalorder %s183, %s184
      %p198 = scmp.eq.s32.totalorder %s24, 1
      %p199 = por %p197, %p198
      %p201 = scmp.ne.s32.totalorder %s184, %s200
      %p202 = scmp.eq.s32.totalorder %s24, 0
      %p203 = por %p201, %p202
      %p204 = scmp.le.s32.totalorder 1, %s18
      %p205 = scmp.lt.s32.totalorder %s18, 3
      %p206 = pnand %p204, %p205
      %p207 = pneg %p206
      // Predicated region
      $region9: #{fcn_forward.1} parent=5 // pred_check
        _
      $region10: #{fcn_forward.1} parent=5 // pred_check_branch
        %209 = sbr.rel (%p206) target = $region12
      $region11: #{fcn_forward.1} parent=5 // pred_region
        %s210 = ssub.s32 %s18, 1
        // Predicated region
        $region13: #{fcn_forward.1} parent=11 // pred_check
          %p211 = pneg %p65
        $region14: #{fcn_forward.1} parent=11 // pred_check_branch
          %213 = sbr.rel (%p211) target = $region16
        $region15: #{fcn_forward.1} parent=11 // pred_region
          %s215 = ssub.s32 2304, 2304
          %216 = vsyncadd [#allocation3], %s215
          %s217 = sshll.u32 [#allocation2], 4
          %s218 = int_to_ptr.vmem [resolvable:$true] %s217
          %223 = dma.hbm_to_vmem [thread:$0]  %s1, 2304, %s218, [#allocation3], 128, 128, 8
        $region16: #{fcn_forward.1} parent=11 // pred_fallthru
          _
        // Predicated region
        $region17: #{fcn_forward.1} parent=11 // pred_check
          %p224 = pneg %p86
        $region18: #{fcn_forward.1} parent=11 // pred_check_branch
          %226 = sbr.rel (%p224) target = $region20
        $region19: #{fcn_forward.1} parent=11 // pred_region
          _
        $region20: #{fcn_forward.1} parent=11 // pred_fallthru
          _
        // Predicated region
        $region21: #{fcn_forward.1} parent=11 // pred_check
          %p227 = pneg %p107
        $region22: #{fcn_forward.1} parent=11 // pred_check_branch
          %229 = sbr.rel (%p227) target = $region24
        $region23: #{fcn_forward.1} parent=11 // pred_region
          %s231 = ssub.s32 20480, 20480
          %232 = vsyncadd [#allocation6], %s231
          %s233 = sshll.u32 [#allocation5], 4
          %s234 = int_to_ptr.vmem [resolvable:$true] %s233
          %239 = dma.hbm_to_vmem [thread:$0]  %s3, 20480, %s234, [#allocation6], 256, 256, 16
        $region24: #{fcn_forward.1} parent=11 // pred_fallthru
          _
        // Predicated region
        $region25: #{fcn_forward.1} parent=11 // pred_check
          %p240 = pneg %p128
        $region26: #{fcn_forward.1} parent=11 // pred_check_branch
          %242 = sbr.rel (%p240) target = $region28
        $region27: #{fcn_forward.1} parent=11 // pred_region
          _
        $region28: #{fcn_forward.1} parent=11 // pred_fallthru
          _
        // Predicated region
        $region29: #{fcn_forward.1} parent=11 // pred_check
          %p243 = pneg %p149
        $region30: #{fcn_forward.1} parent=11 // pred_check_branch
          %245 = sbr.rel (%p243) target = $region32
        $region31: #{fcn_forward.1} parent=11 // pred_region
          %s247 = ssub.s32 24576, 24576
          %248 = vsyncadd [#allocation6], %s247
          %s249 = sshll.u32 [#allocation7], 4
          %s250 = int_to_ptr.vmem [resolvable:$true] %s249
          %255 = dma.hbm_to_vmem [thread:$0]  %s5, 24576, %s250, [#allocation6], 256, 256, 16
        $region32: #{fcn_forward.1} parent=11 // pred_fallthru
          _
        // Predicated region
        $region33: #{fcn_forward.1} parent=11 // pred_check
          %p256 = pneg %p170
        $region34: #{fcn_forward.1} parent=11 // pred_check_branch
          %258 = sbr.rel (%p256) target = $region36
        $region35: #{fcn_forward.1} parent=11 // pred_region
          _
        $region36: #{fcn_forward.1} parent=11 // pred_fallthru
          _
      $region12: #{fcn_forward.1} parent=5 // pred_fallthru
        _
      %p259 = scmp.lt.s32.totalorder %s18, 2
      // Predicated region
      $region37: #{fcn_forward.1} parent=5 // pred_check
        %p260 = pneg %p259
      $region38: #{fcn_forward.1} parent=5 // pred_check_branch
        %262 = sbr.rel (%p260) target = $region40
      $region39: #{fcn_forward.1} parent=5 // pred_region
        // Predicated region
        $region41: #{fcn_forward.1} parent=39 // pred_check
          %p263 = pneg %p38
        $region42: #{fcn_forward.1} parent=39 // pred_check_branch
          %265 = sbr.rel (%p263) target = $region44
        $region43: #{fcn_forward.1} parent=39 // pred_region
          %p266 = scmp.lt.s32.totalorder %s18, 1
          %s267 = scalar_select %p266, %s18, 1
          %s268 = smul.addr %s267, 2
          %s269 = smul.addr %s268, 8
          %s270 = scalar_lea.vmem %s0, %s269
        $region44: #{fcn_forward.1} parent=39 // pred_fallthru
          _
      $region40: #{fcn_forward.1} parent=5 // pred_fallthru
        _
      %p271 = scmp.le.s32.totalorder 1, %s18
      %p272 = scmp.lt.s32.totalorder %s18, 3
      %p273 = pnand %p271, %p272
      %p274 = pneg %p273
      // Predicated region
      $region45: #{fcn_forward.1} parent=5 // pred_check
        _
      $region46: #{fcn_forward.1} parent=5 // pred_check_branch
        %276 = sbr.rel (%p273) target = $region48
      $region47: #{fcn_forward.1} parent=5 // pred_region
        %s277 = ssub.s32 %s18, 1
        // Predicated region
        $region49: #{fcn_forward.1} parent=47 // pred_check
          %p278 = pneg %p65
        $region50: #{fcn_forward.1} parent=47 // pred_check_branch
          %280 = sbr.rel (%p278) target = $region52
        $region51: #{fcn_forward.1} parent=47 // pred_region
          %281 = dma.done [#allocation3], 2304
        $region52: #{fcn_forward.1} parent=47 // pred_fallthru
          _
        // Predicated region
        $region53: #{fcn_forward.1} parent=47 // pred_check
          %p282 = pneg %p107
        $region54: #{fcn_forward.1} parent=47 // pred_check_branch
          %284 = sbr.rel (%p282) target = $region56
        $region55: #{fcn_forward.1} parent=47 // pred_region
          %285 = dma.done [#allocation6], 20480
        $region56: #{fcn_forward.1} parent=47 // pred_fallthru
          _
        // Predicated region
        $region57: #{fcn_forward.1} parent=47 // pred_check
          %p286 = pneg %p149
        $region58: #{fcn_forward.1} parent=47 // pred_check_branch
          %288 = sbr.rel (%p286) target = $region60
        $region59: #{fcn_forward.1} parent=47 // pred_region
          %289 = dma.done [#allocation6], 24576
        $region60: #{fcn_forward.1} parent=47 // pred_fallthru
          _
        %p290 = scmp.lt.s32.totalorder %s23, 1
        %s291 = scalar_select %p290, %s23, 1
        %s292 = smul.addr %s291, 2
        %s293 = smul.addr %s292, 8
        %s294 = scalar_lea.vmem %s0, %s293
        %p295 = pneg %p44
        %p296 = pneg %p41
        %p297 = pneg %p65
        %p298 = pneg %p62
        %p299 = pneg %p86
        %p300 = pneg %p83
        %p301 = pneg %p107
        %p302 = pneg %p104
        %p303 = pneg %p128
        %p304 = pneg %p125
        %p305 = pneg %p149
        %p306 = pneg %p146
        %p307 = pneg %p170
        %p308 = pneg %p167
        %p309 = pneg %p196
        %p310 = pneg %p193
        %s311 = sand.u32 %s183, 1
        %s312 = scalar_lea.sflag [#allocation4], %s311
        %s313 = sand.u32 %s183, 1
        %s314 = smul.addr %s313, 32
        %s315 = scalar_lea.vmem [#allocation8], %s314
        %p316 = scmp.lt.s32.totalorder %s23, 1
        %s317 = scalar_select %p316, %s23, 1
        %s318 = smul.addr %s317, 2
        %s319 = smul.addr %s318, 8
        %s320 = scalar_lea.vmem %s0, %s319
        %v321 = vld [vmem:[%s320] sm:$0xff]
        %v322 = vld [vmem:[%s320 + $0x8] sm:$0xff]
        %v323 = vld [vmem:[#allocation2] sm:$0xff]
        %v324 = vld [vmem:[#allocation2 + $0x8] sm:$0xff]
        %v325 = vld [vmem:[#allocation2 + $0x10] sm:$0xff]
        %v326 = vld [vmem:[#allocation2 + $0x18] sm:$0xff]
        %v327 = vld [vmem:[#allocation2 + $0x20] sm:$0xff]
        %v328 = vld [vmem:[#allocation2 + $0x28] sm:$0xff]
        %v329 = vld [vmem:[#allocation2 + $0x30] sm:$0xff]
        %v330 = vld [vmem:[#allocation2 + $0x38] sm:$0xff]
        %v331 = vld [vmem:[#allocation2 + $0x40] sm:$0xff]
        %v332 = vld [vmem:[#allocation2 + $0x48] sm:$0xff]
        %v333 = vld [vmem:[#allocation2 + $0x50] sm:$0xff]
        %v334 = vld [vmem:[#allocation2 + $0x58] sm:$0xff]
        %v335 = vld [vmem:[#allocation2 + $0x60] sm:$0xff]
        %v336 = vld [vmem:[#allocation2 + $0x68] sm:$0xff]
        %v337 = vld [vmem:[#allocation2 + $0x70] sm:$0xff]
        %v338 = vld [vmem:[#allocation2 + $0x78] sm:$0xff]
        %v339 = vld [vmem:[#allocation2 + $0x80] sm:$0xff]
        %v340 = vld [vmem:[#allocation2 + $0x88] sm:$0xff]
        %v341 = vld [vmem:[%s2] sm:$0x1]
        %vm344 = vcmask 1043456
        %v345 = vrot.slane %v321, 4
        %v346 = vrot.slane %v322, 4
        %v347 = vsel %vm344, %v345, %v346
        %v351 = vsel %vm344, 0.0, %v345
        %v352 = vsel %vm344, %v346, 0.0
        %vm355 = vcmask 1046528
        %v356 = vrot.slane %v351, 1
        %v357 = vrot.slane %v347, 1
        %v358 = vsel %vm355, %v356, %v357
        %v359 = vrot.slane %v352, 1
        %v360 = vsel %vm355, %v357, %v359
        %361 = vrot.lane.b32.xlu0 %v358, 16
        %v362 = vpop.permute.xlu0 %361
        %363 = vrot.lane.b32.xlu0 %v360, 16
        %v364 = vpop.permute.xlu0 %363
        %vm367 = vcmask 1045504
        %v368 = vrot.slane %v351, 2
        %v369 = vrot.slane %v347, 2
        %v370 = vsel %vm367, %v368, %v369
        %v371 = vrot.slane %v352, 2
        %v372 = vsel %vm367, %v369, %v371
        %373 = vrot.lane.b32.xlu0 %v370, 32
        %v374 = vpop.permute.xlu0 %373
        %375 = vrot.lane.b32.xlu0 %v372, 32
        %v376 = vpop.permute.xlu0 %375
        %vm379 = vcmask 1044480
        %v380 = vrot.slane %v351, 3
        %v381 = vrot.slane %v347, 3
        %v382 = vsel %vm379, %v380, %v381
        %v383 = vrot.slane %v352, 3
        %v384 = vsel %vm379, %v381, %v383
        %385 = vrot.lane.b32.xlu0 %v382, 48
        %v386 = vpop.permute.xlu0 %385
        %387 = vrot.lane.b32.xlu0 %v384, 48
        %v388 = vpop.permute.xlu0 %387
        %v391 = vrot.slane %v351, 4
        %v392 = vrot.slane %v347, 4
        %v393 = vsel %vm344, %v391, %v392
        %v394 = vrot.slane %v352, 4
        %v395 = vsel %vm344, %v392, %v394
        %396 = vrot.lane.b32.xlu0 %v393, 64
        %v397 = vpop.permute.xlu0 %396
        %398 = vrot.lane.b32.xlu0 %v395, 64
        %v399 = vpop.permute.xlu0 %398
        %vm402 = vcmask 1042432
        %v403 = vrot.slane %v351, 5
        %v404 = vrot.slane %v347, 5
        %v405 = vsel %vm402, %v403, %v404
        %v406 = vrot.slane %v352, 5
        %v407 = vsel %vm402, %v404, %v406
        %408 = vrot.lane.b32.xlu0 %v405, 80
        %v409 = vpop.permute.xlu0 %408
        %410 = vrot.lane.b32.xlu0 %v407, 80
        %v411 = vpop.permute.xlu0 %410
        %vm414 = vcmask 1041408
        %v415 = vrot.slane %v351, 6
        %v416 = vrot.slane %v347, 6
        %v417 = vsel %vm414, %v415, %v416
        %v418 = vrot.slane %v352, 6
        %v419 = vsel %vm414, %v416, %v418
        %420 = vrot.lane.b32.xlu0 %v417, 96
        %v421 = vpop.permute.xlu0 %420
        %422 = vrot.lane.b32.xlu0 %v419, 96
        %v423 = vpop.permute.xlu0 %422
        %vm426 = vcmask 1040384
        %v427 = vrot.slane %v351, 7
        %v428 = vrot.slane %v347, 7
        %v429 = vsel %vm426, %v427, %v428
        %v430 = vrot.slane %v352, 7
        %v431 = vsel %vm426, %v428, %v430
        %432 = vrot.lane.b32.xlu0 %v429, 112
        %v433 = vpop.permute.xlu0 %432
        %434 = vrot.lane.b32.xlu0 %v431, 112
        %v435 = vpop.permute.xlu0 %434
        %vm438 = vcmask 130048
        %v439 = vsel %vm438, %v351, %v362
        %v440 = vsel %vm438, %v347, %v364
        %vm441 = vcmask 261120
        %v442 = vsel %vm441, %v439, %v374
        %v443 = vsel %vm441, %v440, %v376
        %vm444 = vcmask 392192
        %v445 = vsel %vm444, %v442, %v386
        %v446 = vsel %vm444, %v443, %v388
        %vm447 = vcmask 523264
        %v448 = vsel %vm447, %v445, %v397
        %v449 = vsel %vm447, %v446, %v399
        %vm450 = vcmask 654336
        %v451 = vsel %vm450, %v448, %v409
        %v452 = vsel %vm450, %v449, %v411
        %vm453 = vcmask 785408
        %v454 = vsel %vm453, %v451, %v421
        %v455 = vsel %vm453, %v452, %v423
        %vm456 = vcmask 916480
        %v457 = vsel %vm456, %v454, %v433
        %v458 = vsel %vm456, %v455, %v435
        %v460 = vlaneseq
        %v461 = vshrl.u32 %v460, 7
        %v462 = vsub.s32 0, %v461
        %v463 = vrot.slane %v341, %v462
        %v465 = vsel %vm438, %v347, 0
        %v467 = vsel %vm438, %v352, 0
        %469 = vmatprep.subr.mxu0 0.0
        %470 = vmatpush1.msra.mxu0 %v323
        %471 = vmatprep.subr.mxu0 0.0
        %472 = vmatpush1.msra.mxu0 %v324
        %473 = vmatprep.subr.mxu0 0.0
        %474 = vmatpush1.msra.mxu0 %v325
        %475 = vmatprep.subr.mxu0 0.0
        %476 = vmatpush1.msra.mxu0 %v326
        %477 = vmatprep.subr.mxu0 0.0
        %478 = vmatpush1.msra.mxu0 %v327
        %479 = vmatprep.subr.mxu0 0.0
        %480 = vmatpush1.msra.mxu0 %v328
        %481 = vmatprep.subr.mxu0 0.0
        %482 = vmatpush1.msra.mxu0 %v329
        %483 = vmatprep.subr.mxu0 0.0
        %484 = vmatpush1.msra.mxu0 %v330
        %485 = vmatprep.subr.mxu0 0.0
        %486 = vmatpush1.msra.mxu0 %v331
        %487 = vmatprep.subr.mxu0 0.0
        %488 = vmatpush1.msra.mxu0 %v332
        %489 = vmatprep.subr.mxu0 0.0
        %490 = vmatpush1.msra.mxu0 %v333
        %491 = vmatprep.subr.mxu0 0.0
        %492 = vmatpush1.msra.mxu0 %v334
        %493 = vmatprep.subr.mxu0 0.0
        %494 = vmatpush1.msra.mxu0 %v335
        %495 = vmatprep.subr.mxu0 0.0
        %496 = vmatpush1.msra.mxu0 %v336
        %497 = vmatprep.subr.mxu0 0.0
        %498 = vmatpush1.msra.mxu0 %v337
        %499 = vmatprep.subr.mxu0 0.0
        %500 = vmatpush1.msra.mxu0 %v338
        %501 = vmatprep.subr.mxu0 0.0
        %502 = vmatpush1.msra.mxu0 %v339
        %503 = vmatprep.subr.mxu0 0.0
        %504 = vmatpush1.msra.mxu0 %v340
        %505 = vmatprep.subr.mxu0 0.0
        %506 = vmatpush1.msra.mxu0 0.0
        %507 = vmatprep.subr.mxu0 0.0
        %508 = vmatpush1.msra.mxu0 0.0
        %509 = vmatprep.subr.mxu0 0.0
        %510 = vmatpush1.msra.mxu0 0.0
        %511 = vmatprep.subr.mxu0 0.0
        %512 = vmatpush1.msra.mxu0 0.0
        %513 = vmatprep.subr.mxu0 0.0
        %514 = vmatpush1.msra.mxu0 0.0
        %515 = vmatprep.subr.mxu0 0.0
        %516 = vmatpush1.msra.mxu0 0.0
        %517 = vmatprep.subr.mxu0 0.0
        %518 = vmatpush1.msra.mxu0 0.0
        %519 = vmatprep.subr.mxu0 0.0
        %520 = vmatpush1.msra.mxu0 0.0
        %521 = vmatprep.subr.mxu0 0.0
        %522 = vmatpush1.msra.mxu0 0.0
        %523 = vmatprep.subr.mxu0 0.0
        %524 = vmatpush1.msra.mxu0 0.0
        %525 = vmatprep.subr.mxu0 0.0
        %526 = vmatpush1.msra.mxu0 0.0
        %527 = vmatprep.subr.mxu0 0.0
        %528 = vmatpush1.msra.mxu0 0.0
        %529 = vmatprep.subr.mxu0 0.0
        %530 = vmatpush1.msra.mxu0 0.0
        %531 = vmatprep.subr.mxu0 0.0
        %532 = vmatpush1.msra.mxu0 0.0
        %533 = vmatprep.mubr.f32.mxu0 %v465
        %534 = vmatmul.mubr.f32.gmra.mrb[0].mxu0 %v457
        %v535 = vpop.f32.mrb[0].mxu0
        %v536 = vadd.f32 %v463, %v535
        %v537 = vpop.f32.mrb[0].mxu0
        %538 = vmatprep.mubr.f32.mxu0 %v467
        %539 = vmatmul.mubr.f32.gmra.mrb[0].mxu0 %v458
        %v540 = vpop.f32.mrb[0].mxu0
        %v541 = vadd.f32 %v463, %v540
        %v542 = vpop.f32.mrb[0].mxu0
        %543 = vdwg.mxu0
        %v544 = vmax.f32 %v536, 0.0
        %v545 = vmax.f32 %v541, 0.0
        %v546 = vld [vmem:[#allocation5] sm:$0xff]
        %v547 = vld [vmem:[#allocation5 + $0x8] sm:$0xff]
        %v548 = vld [vmem:[#allocation5 + $0x10] sm:$0xff]
        %v549 = vld [vmem:[#allocation5 + $0x18] sm:$0xff]
        %v550 = vld [vmem:[#allocation5 + $0x20] sm:$0xff]
        %v551 = vld [vmem:[#allocation5 + $0x28] sm:$0xff]
        %v552 = vld [vmem:[#allocation5 + $0x30] sm:$0xff]
        %v553 = vld [vmem:[#allocation5 + $0x38] sm:$0xff]
        %v554 = vld [vmem:[#allocation5 + $0x40] sm:$0xff]
        %v555 = vld [vmem:[#allocation5 + $0x48] sm:$0xff]
        %v556 = vld [vmem:[#allocation5 + $0x50] sm:$0xff]
        %v557 = vld [vmem:[#allocation5 + $0x58] sm:$0xff]
        %v558 = vld [vmem:[#allocation5 + $0x60] sm:$0xff]
        %v559 = vld [vmem:[#allocation5 + $0x68] sm:$0xff]
        %v560 = vld [vmem:[#allocation5 + $0x70] sm:$0xff]
        %v561 = vld [vmem:[#allocation5 + $0x78] sm:$0xff]
        %v562 = vld [vmem:[#allocation5 + $0x80] sm:$0xff]
        %v563 = vld [vmem:[#allocation5 + $0x88] sm:$0xff]
        %v564 = vld [vmem:[#allocation5 + $0x90] sm:$0xff]
        %v565 = vld [vmem:[#allocation5 + $0x98] sm:$0xff]
        %v566 = vld [vmem:[#allocation5 + $0xa0] sm:$0xff]
        %v567 = vld [vmem:[#allocation5 + $0xa8] sm:$0xff]
        %v568 = vld [vmem:[#allocation5 + $0xb0] sm:$0xff]
        %v569 = vld [vmem:[#allocation5 + $0xb8] sm:$0xff]
        %v570 = vld [vmem:[#allocation5 + $0xc0] sm:$0xff]
        %v571 = vld [vmem:[#allocation5 + $0xc8] sm:$0xff]
        %v572 = vld [vmem:[#allocation5 + $0xd0] sm:$0xff]
        %v573 = vld [vmem:[#allocation5 + $0xd8] sm:$0xff]
        %v574 = vld [vmem:[#allocation5 + $0xe0] sm:$0xff]
        %v575 = vld [vmem:[#allocation5 + $0xe8] sm:$0xff]
        %v576 = vld [vmem:[#allocation5 + $0xf0] sm:$0xff]
        %v577 = vld [vmem:[#allocation5 + $0xf8] sm:$0xff]
        %v578 = vld [vmem:[#allocation5 + $0x100] sm:$0xff]
        %v579 = vld [vmem:[#allocation5 + $0x108] sm:$0xff]
        %v580 = vld [vmem:[#allocation5 + $0x110] sm:$0xff]
        %v581 = vld [vmem:[#allocation5 + $0x118] sm:$0xff]
        %v582 = vld [vmem:[#allocation5 + $0x120] sm:$0xff]
        %v583 = vld [vmem:[#allocation5 + $0x128] sm:$0xff]
        %v584 = vld [vmem:[#allocation5 + $0x130] sm:$0xff]
        %v585 = vld [vmem:[#allocation5 + $0x138] sm:$0xff]
        %v586 = vld [vmem:[#allocation5 + $0x140] sm:$0xff]
        %v587 = vld [vmem:[#allocation5 + $0x148] sm:$0xff]
        %v588 = vld [vmem:[#allocation5 + $0x150] sm:$0xff]
        %v589 = vld [vmem:[#allocation5 + $0x158] sm:$0xff]
        %v590 = vld [vmem:[#allocation5 + $0x160] sm:$0xff]
        %v591 = vld [vmem:[#allocation5 + $0x168] sm:$0xff]
        %v592 = vld [vmem:[#allocation5 + $0x170] sm:$0xff]
        %v593 = vld [vmem:[#allocation5 + $0x178] sm:$0xff]
        %v594 = vld [vmem:[#allocation5 + $0x180] sm:$0xff]
        %v595 = vld [vmem:[#allocation5 + $0x188] sm:$0xff]
        %v596 = vld [vmem:[#allocation5 + $0x190] sm:$0xff]
        %v597 = vld [vmem:[#allocation5 + $0x198] sm:$0xff]
        %v598 = vld [vmem:[#allocation5 + $0x1a0] sm:$0xff]
        %v599 = vld [vmem:[#allocation5 + $0x1a8] sm:$0xff]
        %v600 = vld [vmem:[#allocation5 + $0x1b0] sm:$0xff]
        %v601 = vld [vmem:[#allocation5 + $0x1b8] sm:$0xff]
        %v602 = vld [vmem:[#allocation5 + $0x1c0] sm:$0xff]
        %v603 = vld [vmem:[#allocation5 + $0x1c8] sm:$0xff]
        %v604 = vld [vmem:[#allocation5 + $0x1d0] sm:$0xff]
        %v605 = vld [vmem:[#allocation5 + $0x1d8] sm:$0xff]
        %v606 = vld [vmem:[#allocation5 + $0x1e0] sm:$0xff]
        %v607 = vld [vmem:[#allocation5 + $0x1e8] sm:$0xff]
        %v608 = vld [vmem:[#allocation5 + $0x1f0] sm:$0xff]
        %v609 = vld [vmem:[#allocation5 + $0x1f8] sm:$0xff]
        %v610 = vld [vmem:[#allocation5 + $0x200] sm:$0xff]
        %v611 = vld [vmem:[#allocation5 + $0x208] sm:$0xff]
        %v612 = vld [vmem:[#allocation5 + $0x210] sm:$0xff]
        %v613 = vld [vmem:[#allocation5 + $0x218] sm:$0xff]
        %v614 = vld [vmem:[#allocation5 + $0x220] sm:$0xff]
        %v615 = vld [vmem:[#allocation5 + $0x228] sm:$0xff]
        %v616 = vld [vmem:[#allocation5 + $0x230] sm:$0xff]
        %v617 = vld [vmem:[#allocation5 + $0x238] sm:$0xff]
        %v618 = vld [vmem:[#allocation5 + $0x240] sm:$0xff]
        %v619 = vld [vmem:[#allocation5 + $0x248] sm:$0xff]
        %v620 = vld [vmem:[#allocation5 + $0x250] sm:$0xff]
        %v621 = vld [vmem:[#allocation5 + $0x258] sm:$0xff]
        %v622 = vld [vmem:[#allocation5 + $0x260] sm:$0xff]
        %v623 = vld [vmem:[#allocation5 + $0x268] sm:$0xff]
        %v624 = vld [vmem:[#allocation5 + $0x270] sm:$0xff]
        %v625 = vld [vmem:[#allocation5 + $0x278] sm:$0xff]
        %v626 = vld [vmem:[#allocation5 + $0x280] sm:$0xff]
        %v627 = vld [vmem:[#allocation5 + $0x288] sm:$0xff]
        %v628 = vld [vmem:[#allocation5 + $0x290] sm:$0xff]
        %v629 = vld [vmem:[#allocation5 + $0x298] sm:$0xff]
        %v630 = vld [vmem:[#allocation5 + $0x2a0] sm:$0xff]
        %v631 = vld [vmem:[#allocation5 + $0x2a8] sm:$0xff]
        %v632 = vld [vmem:[#allocation5 + $0x2b0] sm:$0xff]
        %v633 = vld [vmem:[#allocation5 + $0x2b8] sm:$0xff]
        %v634 = vld [vmem:[#allocation5 + $0x2c0] sm:$0xff]
        %v635 = vld [vmem:[#allocation5 + $0x2c8] sm:$0xff]
        %v636 = vld [vmem:[#allocation5 + $0x2d0] sm:$0xff]
        %v637 = vld [vmem:[#allocation5 + $0x2d8] sm:$0xff]
        %v638 = vld [vmem:[#allocation5 + $0x2e0] sm:$0xff]
        %v639 = vld [vmem:[#allocation5 + $0x2e8] sm:$0xff]
        %v640 = vld [vmem:[#allocation5 + $0x2f0] sm:$0xff]
        %v641 = vld [vmem:[#allocation5 + $0x2f8] sm:$0xff]
        %v642 = vld [vmem:[#allocation5 + $0x300] sm:$0xff]
        %v643 = vld [vmem:[#allocation5 + $0x308] sm:$0xff]
        %v644 = vld [vmem:[#allocation5 + $0x310] sm:$0xff]
        %v645 = vld [vmem:[#allocation5 + $0x318] sm:$0xff]
        %v646 = vld [vmem:[#allocation5 + $0x320] sm:$0xff]
        %v647 = vld [vmem:[#allocation5 + $0x328] sm:$0xff]
        %v648 = vld [vmem:[#allocation5 + $0x330] sm:$0xff]
        %v649 = vld [vmem:[#allocation5 + $0x338] sm:$0xff]
        %v650 = vld [vmem:[#allocation5 + $0x340] sm:$0xff]
        %v651 = vld [vmem:[#allocation5 + $0x348] sm:$0xff]
        %v652 = vld [vmem:[#allocation5 + $0x350] sm:$0xff]
        %v653 = vld [vmem:[#allocation5 + $0x358] sm:$0xff]
        %v654 = vld [vmem:[#allocation5 + $0x360] sm:$0xff]
        %v655 = vld [vmem:[#allocation5 + $0x368] sm:$0xff]
        %v656 = vld [vmem:[#allocation5 + $0x370] sm:$0xff]
        %v657 = vld [vmem:[#allocation5 + $0x378] sm:$0xff]
        %v658 = vld [vmem:[#allocation5 + $0x380] sm:$0xff]
        %v659 = vld [vmem:[#allocation5 + $0x388] sm:$0xff]
        %v660 = vld [vmem:[#allocation5 + $0x390] sm:$0xff]
        %v661 = vld [vmem:[#allocation5 + $0x398] sm:$0xff]
        %v662 = vld [vmem:[#allocation5 + $0x3a0] sm:$0xff]
        %v663 = vld [vmem:[#allocation5 + $0x3a8] sm:$0xff]
        %v664 = vld [vmem:[#allocation5 + $0x3b0] sm:$0xff]
        %v665 = vld [vmem:[#allocation5 + $0x3b8] sm:$0xff]
        %v666 = vld [vmem:[#allocation5 + $0x3c0] sm:$0xff]
        %v667 = vld [vmem:[#allocation5 + $0x3c8] sm:$0xff]
        %v668 = vld [vmem:[#allocation5 + $0x3d0] sm:$0xff]
        %v669 = vld [vmem:[#allocation5 + $0x3d8] sm:$0xff]
        %v670 = vld [vmem:[#allocation5 + $0x3e0] sm:$0xff]
        %v671 = vld [vmem:[#allocation5 + $0x3e8] sm:$0xff]
        %v672 = vld [vmem:[#allocation5 + $0x3f0] sm:$0xff]
        %v673 = vld [vmem:[#allocation5 + $0x3f8] sm:$0xff]
        %v674 = vld [vmem:[#allocation5 + $0x400] sm:$0xff]
        %v675 = vld [vmem:[#allocation5 + $0x408] sm:$0xff]
        %v676 = vld [vmem:[#allocation5 + $0x410] sm:$0xff]
        %v677 = vld [vmem:[#allocation5 + $0x418] sm:$0xff]
        %v678 = vld [vmem:[#allocation5 + $0x420] sm:$0xff]
        %v679 = vld [vmem:[#allocation5 + $0x428] sm:$0xff]
        %v680 = vld [vmem:[#allocation5 + $0x430] sm:$0xff]
        %v681 = vld [vmem:[#allocation5 + $0x438] sm:$0xff]
        %v682 = vld [vmem:[#allocation5 + $0x440] sm:$0xff]
        %v683 = vld [vmem:[#allocation5 + $0x448] sm:$0xff]
        %v684 = vld [vmem:[#allocation5 + $0x450] sm:$0xff]
        %v685 = vld [vmem:[#allocation5 + $0x458] sm:$0xff]
        %v686 = vld [vmem:[#allocation5 + $0x460] sm:$0xff]
        %v687 = vld [vmem:[#allocation5 + $0x468] sm:$0xff]
        %v688 = vld [vmem:[#allocation5 + $0x470] sm:$0xff]
        %v689 = vld [vmem:[#allocation5 + $0x478] sm:$0xff]
        %v690 = vld [vmem:[#allocation5 + $0x480] sm:$0xff]
        %v691 = vld [vmem:[#allocation5 + $0x488] sm:$0xff]
        %v692 = vld [vmem:[#allocation5 + $0x490] sm:$0xff]
        %v693 = vld [vmem:[#allocation5 + $0x498] sm:$0xff]
        %v694 = vld [vmem:[#allocation5 + $0x4a0] sm:$0xff]
        %v695 = vld [vmem:[#allocation5 + $0x4a8] sm:$0xff]
        %v696 = vld [vmem:[#allocation5 + $0x4b0] sm:$0xff]
        %v697 = vld [vmem:[#allocation5 + $0x4b8] sm:$0xff]
        %v698 = vld [vmem:[#allocation5 + $0x4c0] sm:$0xff]
        %v699 = vld [vmem:[#allocation5 + $0x4c8] sm:$0xff]
        %v700 = vld [vmem:[#allocation5 + $0x4d0] sm:$0xff]
        %v701 = vld [vmem:[#allocation5 + $0x4d8] sm:$0xff]
        %v702 = vld [vmem:[#allocation5 + $0x4e0] sm:$0xff]
        %v703 = vld [vmem:[#allocation5 + $0x4e8] sm:$0xff]
        %v704 = vld [vmem:[#allocation5 + $0x4f0] sm:$0xff]
        %v705 = vld [vmem:[#allocation5 + $0x4f8] sm:$0xff]
        %v706 = vld [vmem:[%s4] sm:$0x3]
        %v709 = vrot.slane %v544, 6
        %v710 = vrot.slane %v545, 6
        %v711 = vsel %vm414, %v709, %v710
        %v715 = vsel %vm414, 0.0, %v709
        %v716 = vsel %vm414, %v710, 0.0
        %v719 = vrot.slane %v715, 1
        %v720 = vrot.slane %v711, 1
        %v721 = vsel %vm355, %v719, %v720
        %v722 = vrot.slane %v716, 1
        %v723 = vsel %vm355, %v720, %v722
        %v726 = vrot.slane %v715, 2
        %v727 = vrot.slane %v711, 2
        %v728 = vsel %vm367, %v726, %v727
        %v729 = vrot.slane %v716, 2
        %v730 = vsel %vm367, %v727, %v729
        %v733 = vrot.slane %v715, 3
        %v734 = vrot.slane %v711, 3
        %v735 = vsel %vm379, %v733, %v734
        %v736 = vrot.slane %v716, 3
        %v737 = vsel %vm379, %v734, %v736
        %v740 = vrot.slane %v715, 4
        %v741 = vrot.slane %v711, 4
        %v742 = vsel %vm344, %v740, %v741
        %v743 = vrot.slane %v716, 4
        %v744 = vsel %vm344, %v741, %v743
        %v748 = vlaneseq
        %v749 = vshrl.u32 %v748, 7
        %v750 = vsub.s32 0, %v749
        %v751 = vrot.slane %v706, %v750
        %v752 = vlaneseq
        %v753 = vshrl.u32 %v752, 7
        %v754 = vsub.s32 1, %v753
        %v755 = vrot.slane %v706, %v754
        %758 = vmatprep.subr.mxu0 %v547
        %759 = vmatpush1.msra.mxu0 %v546
        %760 = vmatprep.subr.mxu0 %v549
        %761 = vmatpush1.msra.mxu0 %v548
        %762 = vmatprep.subr.mxu0 %v551
        %763 = vmatpush1.msra.mxu0 %v550
        %764 = vmatprep.subr.mxu0 %v553
        %765 = vmatpush1.msra.mxu0 %v552
        %766 = vmatprep.subr.mxu0 %v555
        %767 = vmatpush1.msra.mxu0 %v554
        %768 = vmatprep.subr.mxu0 %v557
        %769 = vmatpush1.msra.mxu0 %v556
        %770 = vmatprep.subr.mxu0 %v559
        %771 = vmatpush1.msra.mxu0 %v558
        %772 = vmatprep.subr.mxu0 %v561
        %773 = vmatpush1.msra.mxu0 %v560
        %774 = vmatprep.subr.mxu0 %v563
        %775 = vmatpush1.msra.mxu0 %v562
        %776 = vmatprep.subr.mxu0 %v565
        %777 = vmatpush1.msra.mxu0 %v564
        %778 = vmatprep.subr.mxu0 %v567
        %779 = vmatpush1.msra.mxu0 %v566
        %780 = vmatprep.subr.mxu0 %v569
        %781 = vmatpush1.msra.mxu0 %v568
        %782 = vmatprep.subr.mxu0 %v571
        %783 = vmatpush1.msra.mxu0 %v570
        %784 = vmatprep.subr.mxu0 %v573
        %785 = vmatpush1.msra.mxu0 %v572
        %786 = vmatprep.subr.mxu0 %v575
        %787 = vmatpush1.msra.mxu0 %v574
        %788 = vmatprep.subr.mxu0 %v577
        %789 = vmatpush1.msra.mxu0 %v576
        %790 = vmatprep.subr.mxu0 %v579
        %791 = vmatpush1.msra.mxu0 %v578
        %792 = vmatprep.subr.mxu0 %v581
        %793 = vmatpush1.msra.mxu0 %v580
        %794 = vmatprep.subr.mxu0 %v583
        %795 = vmatpush1.msra.mxu0 %v582
        %796 = vmatprep.subr.mxu0 %v585
        %797 = vmatpush1.msra.mxu0 %v584
        %798 = vmatprep.subr.mxu0 %v587
        %799 = vmatpush1.msra.mxu0 %v586
        %800 = vmatprep.subr.mxu0 %v589
        %801 = vmatpush1.msra.mxu0 %v588
        %802 = vmatprep.subr.mxu0 %v591
        %803 = vmatpush1.msra.mxu0 %v590
        %804 = vmatprep.subr.mxu0 %v593
        %805 = vmatpush1.msra.mxu0 %v592
        %806 = vmatprep.subr.mxu0 %v595
        %807 = vmatpush1.msra.mxu0 %v594
        %808 = vmatprep.subr.mxu0 %v597
        %809 = vmatpush1.msra.mxu0 %v596
        %810 = vmatprep.subr.mxu0 %v599
        %811 = vmatpush1.msra.mxu0 %v598
        %812 = vmatprep.subr.mxu0 %v601
        %813 = vmatpush1.msra.mxu0 %v600
        %814 = vmatprep.subr.mxu0 %v603
        %815 = vmatpush1.msra.mxu0 %v602
        %816 = vmatprep.subr.mxu0 %v605
        %817 = vmatpush1.msra.mxu0 %v604
        %818 = vmatprep.subr.mxu0 %v607
        %819 = vmatpush1.msra.mxu0 %v606
        %820 = vmatprep.subr.mxu0 %v609
        %821 = vmatpush1.msra.mxu0 %v608
        %822 = vmatprep.mubr.f32.mxu0 %v721
        %823 = vmatmul.mubr.f32.gmra.mrb[0].mxu0 %v715
        %v824 = vpop.f32.mrb[0].mxu0
        %v825 = vadd.f32 %v751, %v824
        %v826 = vpop.f32.mrb[0].mxu0
        %v827 = vadd.f32 %v755, %v826
        %828 = vmatprep.mubr.f32.mxu0 %v723
        %829 = vmatmul.mubr.f32.gmra.mrb[0].mxu0 %v711
        %v830 = vpop.f32.mrb[0].mxu0
        %v831 = vadd.f32 %v751, %v830
        %v832 = vpop.f32.mrb[0].mxu0
        %v833 = vadd.f32 %v755, %v832
        %834 = vdwg.mxu0
        %835 = vmatprep.subr.mxu0 %v611
        %836 = vmatpush1.msra.mxu0 %v610
        %837 = vmatprep.subr.mxu0 %v613
        %838 = vmatpush1.msra.mxu0 %v612
        %839 = vmatprep.subr.mxu0 %v615
        %840 = vmatpush1.msra.mxu0 %v614
        %841 = vmatprep.subr.mxu0 %v617
        %842 = vmatpush1.msra.mxu0 %v616
        %843 = vmatprep.subr.mxu0 %v619
        %844 = vmatpush1.msra.mxu0 %v618
        %845 = vmatprep.subr.mxu0 %v621
        %846 = vmatpush1.msra.mxu0 %v620
        %847 = vmatprep.subr.mxu0 %v623
        %848 = vmatpush1.msra.mxu0 %v622
        %849 = vmatprep.subr.mxu0 %v625
        %850 = vmatpush1.msra.mxu0 %v624
        %851 = vmatprep.subr.mxu0 %v627
        %852 = vmatpush1.msra.mxu0 %v626
        %853 = vmatprep.subr.mxu0 %v629
        %854 = vmatpush1.msra.mxu0 %v628
        %855 = vmatprep.subr.mxu0 %v631
        %856 = vmatpush1.msra.mxu0 %v630
        %857 = vmatprep.subr.mxu0 %v633
        %858 = vmatpush1.msra.mxu0 %v632
        %859 = vmatprep.subr.mxu0 %v635
        %860 = vmatpush1.msra.mxu0 %v634
        %861 = vmatprep.subr.mxu0 %v637
        %862 = vmatpush1.msra.mxu0 %v636
        %863 = vmatprep.subr.mxu0 %v639
        %864 = vmatpush1.msra.mxu0 %v638
        %865 = vmatprep.subr.mxu0 %v641
        %866 = vmatpush1.msra.mxu0 %v640
        %867 = vmatprep.subr.mxu0 %v643
        %868 = vmatpush1.msra.mxu0 %v642
        %869 = vmatprep.subr.mxu0 %v645
        %870 = vmatpush1.msra.mxu0 %v644
        %871 = vmatprep.subr.mxu0 %v647
        %872 = vmatpush1.msra.mxu0 %v646
        %873 = vmatprep.subr.mxu0 %v649
        %874 = vmatpush1.msra.mxu0 %v648
        %875 = vmatprep.subr.mxu0 %v651
        %876 = vmatpush1.msra.mxu0 %v650
        %877 = vmatprep.subr.mxu0 %v653
        %878 = vmatpush1.msra.mxu0 %v652
        %879 = vmatprep.subr.mxu0 %v655
        %880 = vmatpush1.msra.mxu0 %v654
        %881 = vmatprep.subr.mxu0 %v657
        %882 = vmatpush1.msra.mxu0 %v656
        %883 = vmatprep.subr.mxu0 %v659
        %884 = vmatpush1.msra.mxu0 %v658
        %885 = vmatprep.subr.mxu0 %v661
        %886 = vmatpush1.msra.mxu0 %v660
        %887 = vmatprep.subr.mxu0 %v663
        %888 = vmatpush1.msra.mxu0 %v662
        %889 = vmatprep.subr.mxu0 %v665
        %890 = vmatpush1.msra.mxu0 %v664
        %891 = vmatprep.subr.mxu0 %v667
        %892 = vmatpush1.msra.mxu0 %v666
        %893 = vmatprep.subr.mxu0 %v669
        %894 = vmatpush1.msra.mxu0 %v668
        %895 = vmatprep.subr.mxu0 %v671
        %896 = vmatpush1.msra.mxu0 %v670
        %897 = vmatprep.subr.mxu0 %v673
        %898 = vmatpush1.msra.mxu0 %v672
        %899 = vmatprep.mubr.f32.mxu0 %v735
        %900 = vmatmul.mubr.f32.gmra.mrb[0].mxu0 %v728
        %v901 = vpop.f32.mrb[0].mxu0
        %v902 = vadd.f32 %v825, %v901
        %v903 = vpop.f32.mrb[0].mxu0
        %v904 = vadd.f32 %v827, %v903
        %905 = vmatprep.mubr.f32.mxu0 %v737
        %906 = vmatmul.mubr.f32.gmra.mrb[0].mxu0 %v730
        %v907 = vpop.f32.mrb[0].mxu0
        %v908 = vadd.f32 %v831, %v907
        %v909 = vpop.f32.mrb[0].mxu0
        %v910 = vadd.f32 %v833, %v909
        %911 = vdwg.mxu0
        %912 = vmatprep.subr.mxu0 %v675
        %913 = vmatpush1.msra.mxu0 %v674
        %914 = vmatprep.subr.mxu0 %v677
        %915 = vmatpush1.msra.mxu0 %v676
        %916 = vmatprep.subr.mxu0 %v679
        %917 = vmatpush1.msra.mxu0 %v678
        %918 = vmatprep.subr.mxu0 %v681
        %919 = vmatpush1.msra.mxu0 %v680
        %920 = vmatprep.subr.mxu0 %v683
        %921 = vmatpush1.msra.mxu0 %v682
        %922 = vmatprep.subr.mxu0 %v685
        %923 = vmatpush1.msra.mxu0 %v684
        %924 = vmatprep.subr.mxu0 %v687
        %925 = vmatpush1.msra.mxu0 %v686
        %926 = vmatprep.subr.mxu0 %v689
        %927 = vmatpush1.msra.mxu0 %v688
        %928 = vmatprep.subr.mxu0 %v691
        %929 = vmatpush1.msra.mxu0 %v690
        %930 = vmatprep.subr.mxu0 %v693
        %931 = vmatpush1.msra.mxu0 %v692
        %932 = vmatprep.subr.mxu0 %v695
        %933 = vmatpush1.msra.mxu0 %v694
        %934 = vmatprep.subr.mxu0 %v697
        %935 = vmatpush1.msra.mxu0 %v696
        %936 = vmatprep.subr.mxu0 %v699
        %937 = vmatpush1.msra.mxu0 %v698
        %938 = vmatprep.subr.mxu0 %v701
        %939 = vmatpush1.msra.mxu0 %v700
        %940 = vmatprep.subr.mxu0 %v703
        %941 = vmatpush1.msra.mxu0 %v702
        %942 = vmatprep.subr.mxu0 %v705
        %943 = vmatpush1.msra.mxu0 %v704
        %944 = vmatprep.subr.mxu0 0.0
        %945 = vmatpush1.msra.mxu0 0.0
        %946 = vmatprep.subr.mxu0 0.0
        %947 = vmatpush1.msra.mxu0 0.0
        %948 = vmatprep.subr.mxu0 0.0
        %949 = vmatpush1.msra.mxu0 0.0
        %950 = vmatprep.subr.mxu0 0.0
        %951 = vmatpush1.msra.mxu0 0.0
        %952 = vmatprep.subr.mxu0 0.0
        %953 = vmatpush1.msra.mxu0 0.0
        %954 = vmatprep.subr.mxu0 0.0
        %955 = vmatpush1.msra.mxu0 0.0
        %956 = vmatprep.subr.mxu0 0.0
        %957 = vmatpush1.msra.mxu0 0.0
        %958 = vmatprep.subr.mxu0 0.0
        %959 = vmatpush1.msra.mxu0 0.0
        %960 = vmatprep.subr.mxu0 0.0
        %961 = vmatpush1.msra.mxu0 0.0
        %962 = vmatprep.subr.mxu0 0.0
        %963 = vmatpush1.msra.mxu0 0.0
        %964 = vmatprep.subr.mxu0 0.0
        %965 = vmatpush1.msra.mxu0 0.0
        %966 = vmatprep.subr.mxu0 0.0
        %967 = vmatpush1.msra.mxu0 0.0
        %968 = vmatprep.subr.mxu0 0.0
        %969 = vmatpush1.msra.mxu0 0.0
        %970 = vmatprep.subr.mxu0 0.0
        %971 = vmatpush1.msra.mxu0 0.0
        %972 = vmatprep.subr.mxu0 0.0
        %973 = vmatpush1.msra.mxu0 0.0
        %974 = vmatprep.subr.mxu0 0.0
        %975 = vmatpush1.msra.mxu0 0.0
        %976 = vmatprep.mubr.f32.mxu0 0.0
        %977 = vmatmul.mubr.f32.gmra.mrb[0].mxu0 %v742
        %v978 = vpop.f32.mrb[0].mxu0
        %v979 = vadd.f32 %v902, %v978
        %v980 = vpop.f32.mrb[0].mxu0
        %v981 = vadd.f32 %v904, %v980
        %982 = vmatprep.mubr.f32.mxu0 0.0
        %983 = vmatmul.mubr.f32.gmra.mrb[0].mxu0 %v744
        %v984 = vpop.f32.mrb[0].mxu0
        %v985 = vadd.f32 %v908, %v984
        %v986 = vpop.f32.mrb[0].mxu0
        %v987 = vadd.f32 %v910, %v986
        %988 = vdwg.mxu0
        %v989 = vmax.f32 %v979, 0.0
        %v990 = vmax.f32 %v981, 0.0
        %v991 = vmax.f32 %v985, 0.0
        %v992 = vmax.f32 %v987, 0.0
        %v993 = vld [vmem:[#allocation7] sm:$0xff]
        %v994 = vld [vmem:[#allocation7 + $0x8] sm:$0xff]
        %v995 = vld [vmem:[#allocation7 + $0x10] sm:$0xff]
        %v996 = vld [vmem:[#allocation7 + $0x18] sm:$0xff]
        %v997 = vld [vmem:[#allocation7 + $0x20] sm:$0xff]
        %v998 = vld [vmem:[#allocation7 + $0x28] sm:$0xff]
        %v999 = vld [vmem:[#allocation7 + $0x30] sm:$0xff]
        %v1000 = vld [vmem:[#allocation7 + $0x38] sm:$0xff]
        %v1001 = vld [vmem:[#allocation7 + $0x40] sm:$0xff]
        %v1002 = vld [vmem:[#allocation7 + $0x48] sm:$0xff]
        %v1003 = vld [vmem:[#allocation7 + $0x50] sm:$0xff]
        %v1004 = vld [vmem:[#allocation7 + $0x58] sm:$0xff]
        %v1005 = vld [vmem:[#allocation7 + $0x60] sm:$0xff]
        %v1006 = vld [vmem:[#allocation7 + $0x68] sm:$0xff]
        %v1007 = vld [vmem:[#allocation7 + $0x70] sm:$0xff]
        %v1008 = vld [vmem:[#allocation7 + $0x78] sm:$0xff]
        %v1009 = vld [vmem:[#allocation7 + $0x80] sm:$0xff]
        %v1010 = vld [vmem:[#allocation7 + $0x88] sm:$0xff]
        %v1011 = vld [vmem:[#allocation7 + $0x90] sm:$0xff]
        %v1012 = vld [vmem:[#allocation7 + $0x98] sm:$0xff]
        %v1013 = vld [vmem:[#allocation7 + $0xa0] sm:$0xff]
        %v1014 = vld [vmem:[#allocation7 + $0xa8] sm:$0xff]
        %v1015 = vld [vmem:[#allocation7 + $0xb0] sm:$0xff]
        %v1016 = vld [vmem:[#allocation7 + $0xb8] sm:$0xff]
        %v1017 = vld [vmem:[#allocation7 + $0xc0] sm:$0xff]
        %v1018 = vld [vmem:[#allocation7 + $0xc8] sm:$0xff]
        %v1019 = vld [vmem:[#allocation7 + $0xd0] sm:$0xff]
        %v1020 = vld [vmem:[#allocation7 + $0xd8] sm:$0xff]
        %v1021 = vld [vmem:[#allocation7 + $0xe0] sm:$0xff]
        %v1022 = vld [vmem:[#allocation7 + $0xe8] sm:$0xff]
        %v1023 = vld [vmem:[#allocation7 + $0xf0] sm:$0xff]
        %v1024 = vld [vmem:[#allocation7 + $0xf8] sm:$0xff]
        %v1025 = vld [vmem:[#allocation7 + $0x100] sm:$0xff]
        %v1026 = vld [vmem:[#allocation7 + $0x108] sm:$0xff]
        %v1027 = vld [vmem:[#allocation7 + $0x110] sm:$0xff]
        %v1028 = vld [vmem:[#allocation7 + $0x118] sm:$0xff]
        %v1029 = vld [vmem:[#allocation7 + $0x120] sm:$0xff]
        %v1030 = vld [vmem:[#allocation7 + $0x128] sm:$0xff]
        %v1031 = vld [vmem:[#allocation7 + $0x130] sm:$0xff]
        %v1032 = vld [vmem:[#allocation7 + $0x138] sm:$0xff]
        %v1033 = vld [vmem:[#allocation7 + $0x140] sm:$0xff]
        %v1034 = vld [vmem:[#allocation7 + $0x148] sm:$0xff]
        %v1035 = vld [vmem:[#allocation7 + $0x150] sm:$0xff]
        %v1036 = vld [vmem:[#allocation7 + $0x158] sm:$0xff]
        %v1037 = vld [vmem:[#allocation7 + $0x160] sm:$0xff]
        %v1038 = vld [vmem:[#allocation7 + $0x168] sm:$0xff]
        %v1039 = vld [vmem:[#allocation7 + $0x170] sm:$0xff]
        %v1040 = vld [vmem:[#allocation7 + $0x178] sm:$0xff]
        %v1041 = vld [vmem:[#allocation7 + $0x180] sm:$0xff]
        %v1042 = vld [vmem:[#allocation7 + $0x188] sm:$0xff]
        %v1043 = vld [vmem:[#allocation7 + $0x190] sm:$0xff]
        %v1044 = vld [vmem:[#allocation7 + $0x198] sm:$0xff]
        %v1045 = vld [vmem:[#allocation7 + $0x1a0] sm:$0xff]
        %v1046 = vld [vmem:[#allocation7 + $0x1a8] sm:$0xff]
        %v1047 = vld [vmem:[#allocation7 + $0x1b0] sm:$0xff]
        %v1048 = vld [vmem:[#allocation7 + $0x1b8] sm:$0xff]
        %v1049 = vld [vmem:[#allocation7 + $0x1c0] sm:$0xff]
        %v1050 = vld [vmem:[#allocation7 + $0x1c8] sm:$0xff]
        %v1051 = vld [vmem:[#allocation7 + $0x1d0] sm:$0xff]
        %v1052 = vld [vmem:[#allocation7 + $0x1d8] sm:$0xff]
        %v1053 = vld [vmem:[#allocation7 + $0x1e0] sm:$0xff]
        %v1054 = vld [vmem:[#allocation7 + $0x1e8] sm:$0xff]
        %v1055 = vld [vmem:[#allocation7 + $0x1f0] sm:$0xff]
        %v1056 = vld [vmem:[#allocation7 + $0x1f8] sm:$0xff]
        %v1057 = vld [vmem:[#allocation7 + $0x200] sm:$0xff]
        %v1058 = vld [vmem:[#allocation7 + $0x208] sm:$0xff]
        %v1059 = vld [vmem:[#allocation7 + $0x210] sm:$0xff]
        %v1060 = vld [vmem:[#allocation7 + $0x218] sm:$0xff]
        %v1061 = vld [vmem:[#allocation7 + $0x220] sm:$0xff]
        %v1062 = vld [vmem:[#allocation7 + $0x228] sm:$0xff]
        %v1063 = vld [vmem:[#allocation7 + $0x230] sm:$0xff]
        %v1064 = vld [vmem:[#allocation7 + $0x238] sm:$0xff]
        %v1065 = vld [vmem:[#allocation7 + $0x240] sm:$0xff]
        %v1066 = vld [vmem:[#allocation7 + $0x248] sm:$0xff]
        %v1067 = vld [vmem:[#allocation7 + $0x250] sm:$0xff]
        %v1068 = vld [vmem:[#allocation7 + $0x258] sm:$0xff]
        %v1069 = vld [vmem:[#allocation7 + $0x260] sm:$0xff]
        %v1070 = vld [vmem:[#allocation7 + $0x268] sm:$0xff]
        %v1071 = vld [vmem:[#allocation7 + $0x270] sm:$0xff]
        %v1072 = vld [vmem:[#allocation7 + $0x278] sm:$0xff]
        %v1073 = vld [vmem:[#allocation7 + $0x280] sm:$0xff]
        %v1074 = vld [vmem:[#allocation7 + $0x288] sm:$0xff]
        %v1075 = vld [vmem:[#allocation7 + $0x290] sm:$0xff]
        %v1076 = vld [vmem:[#allocation7 + $0x298] sm:$0xff]
        %v1077 = vld [vmem:[#allocation7 + $0x2a0] sm:$0xff]
        %v1078 = vld [vmem:[#allocation7 + $0x2a8] sm:$0xff]
        %v1079 = vld [vmem:[#allocation7 + $0x2b0] sm:$0xff]
        %v1080 = vld [vmem:[#allocation7 + $0x2b8] sm:$0xff]
        %v1081 = vld [vmem:[#allocation7 + $0x2c0] sm:$0xff]
        %v1082 = vld [vmem:[#allocation7 + $0x2c8] sm:$0xff]
        %v1083 = vld [vmem:[#allocation7 + $0x2d0] sm:$0xff]
        %v1084 = vld [vmem:[#allocation7 + $0x2d8] sm:$0xff]
        %v1085 = vld [vmem:[#allocation7 + $0x2e0] sm:$0xff]
        %v1086 = vld [vmem:[#allocation7 + $0x2e8] sm:$0xff]
        %v1087 = vld [vmem:[#allocation7 + $0x2f0] sm:$0xff]
        %v1088 = vld [vmem:[#allocation7 + $0x2f8] sm:$0xff]
        %v1089 = vld [vmem:[#allocation7 + $0x300] sm:$0xff]
        %v1090 = vld [vmem:[#allocation7 + $0x308] sm:$0xff]
        %v1091 = vld [vmem:[#allocation7 + $0x310] sm:$0xff]
        %v1092 = vld [vmem:[#allocation7 + $0x318] sm:$0xff]
        %v1093 = vld [vmem:[#allocation7 + $0x320] sm:$0xff]
        %v1094 = vld [vmem:[#allocation7 + $0x328] sm:$0xff]
        %v1095 = vld [vmem:[#allocation7 + $0x330] sm:$0xff]
        %v1096 = vld [vmem:[#allocation7 + $0x338] sm:$0xff]
        %v1097 = vld [vmem:[#allocation7 + $0x340] sm:$0xff]
        %v1098 = vld [vmem:[#allocation7 + $0x348] sm:$0xff]
        %v1099 = vld [vmem:[#allocation7 + $0x350] sm:$0xff]
        %v1100 = vld [vmem:[#allocation7 + $0x358] sm:$0xff]
        %v1101 = vld [vmem:[#allocation7 + $0x360] sm:$0xff]
        %v1102 = vld [vmem:[#allocation7 + $0x368] sm:$0xff]
        %v1103 = vld [vmem:[#allocation7 + $0x370] sm:$0xff]
        %v1104 = vld [vmem:[#allocation7 + $0x378] sm:$0xff]
        %v1105 = vld [vmem:[#allocation7 + $0x380] sm:$0xff]
        %v1106 = vld [vmem:[#allocation7 + $0x388] sm:$0xff]
        %v1107 = vld [vmem:[#allocation7 + $0x390] sm:$0xff]
        %v1108 = vld [vmem:[#allocation7 + $0x398] sm:$0xff]
        %v1109 = vld [vmem:[#allocation7 + $0x3a0] sm:$0xff]
        %v1110 = vld [vmem:[#allocation7 + $0x3a8] sm:$0xff]
        %v1111 = vld [vmem:[#allocation7 + $0x3b0] sm:$0xff]
        %v1112 = vld [vmem:[#allocation7 + $0x3b8] sm:$0xff]
        %v1113 = vld [vmem:[#allocation7 + $0x3c0] sm:$0xff]
        %v1114 = vld [vmem:[#allocation7 + $0x3c8] sm:$0xff]
        %v1115 = vld [vmem:[#allocation7 + $0x3d0] sm:$0xff]
        %v1116 = vld [vmem:[#allocation7 + $0x3d8] sm:$0xff]
        %v1117 = vld [vmem:[#allocation7 + $0x3e0] sm:$0xff]
        %v1118 = vld [vmem:[#allocation7 + $0x3e8] sm:$0xff]
        %v1119 = vld [vmem:[#allocation7 + $0x3f0] sm:$0xff]
        %v1120 = vld [vmem:[#allocation7 + $0x3f8] sm:$0xff]
        %v1121 = vld [vmem:[#allocation7 + $0x400] sm:$0xff]
        %v1122 = vld [vmem:[#allocation7 + $0x408] sm:$0xff]
        %v1123 = vld [vmem:[#allocation7 + $0x410] sm:$0xff]
        %v1124 = vld [vmem:[#allocation7 + $0x418] sm:$0xff]
        %v1125 = vld [vmem:[#allocation7 + $0x420] sm:$0xff]
        %v1126 = vld [vmem:[#allocation7 + $0x428] sm:$0xff]
        %v1127 = vld [vmem:[#allocation7 + $0x430] sm:$0xff]
        %v1128 = vld [vmem:[#allocation7 + $0x438] sm:$0xff]
        %v1129 = vld [vmem:[#allocation7 + $0x440] sm:$0xff]
        %v1130 = vld [vmem:[#allocation7 + $0x448] sm:$0xff]
        %v1131 = vld [vmem:[#allocation7 + $0x450] sm:$0xff]
        %v1132 = vld [vmem:[#allocation7 + $0x458] sm:$0xff]
        %v1133 = vld [vmem:[#allocation7 + $0x460] sm:$0xff]
        %v1134 = vld [vmem:[#allocation7 + $0x468] sm:$0xff]
        %v1135 = vld [vmem:[#allocation7 + $0x470] sm:$0xff]
        %v1136 = vld [vmem:[#allocation7 + $0x478] sm:$0xff]
        %v1137 = vld [vmem:[#allocation7 + $0x480] sm:$0xff]
        %v1138 = vld [vmem:[#allocation7 + $0x488] sm:$0xff]
        %v1139 = vld [vmem:[#allocation7 + $0x490] sm:$0xff]
        %v1140 = vld [vmem:[#allocation7 + $0x498] sm:$0xff]
        %v1141 = vld [vmem:[#allocation7 + $0x4a0] sm:$0xff]
        %v1142 = vld [vmem:[#allocation7 + $0x4a8] sm:$0xff]
        %v1143 = vld [vmem:[#allocation7 + $0x4b0] sm:$0xff]
        %v1144 = vld [vmem:[#allocation7 + $0x4b8] sm:$0xff]
        %v1145 = vld [vmem:[#allocation7 + $0x4c0] sm:$0xff]
        %v1146 = vld [vmem:[#allocation7 + $0x4c8] sm:$0xff]
        %v1147 = vld [vmem:[#allocation7 + $0x4d0] sm:$0xff]
        %v1148 = vld [vmem:[#allocation7 + $0x4d8] sm:$0xff]
        %v1149 = vld [vmem:[#allocation7 + $0x4e0] sm:$0xff]
        %v1150 = vld [vmem:[#allocation7 + $0x4e8] sm:$0xff]
        %v1151 = vld [vmem:[#allocation7 + $0x4f0] sm:$0xff]
        %v1152 = vld [vmem:[#allocation7 + $0x4f8] sm:$0xff]
        %v1153 = vld [vmem:[#allocation7 + $0x500] sm:$0xff]
        %v1154 = vld [vmem:[#allocation7 + $0x508] sm:$0xff]
        %v1155 = vld [vmem:[#allocation7 + $0x510] sm:$0xff]
        %v1156 = vld [vmem:[#allocation7 + $0x518] sm:$0xff]
        %v1157 = vld [vmem:[#allocation7 + $0x520] sm:$0xff]
        %v1158 = vld [vmem:[#allocation7 + $0x528] sm:$0xff]
        %v1159 = vld [vmem:[#allocation7 + $0x530] sm:$0xff]
        %v1160 = vld [vmem:[#allocation7 + $0x538] sm:$0xff]
        %v1161 = vld [vmem:[#allocation7 + $0x540] sm:$0xff]
        %v1162 = vld [vmem:[#allocation7 + $0x548] sm:$0xff]
        %v1163 = vld [vmem:[#allocation7 + $0x550] sm:$0xff]
        %v1164 = vld [vmem:[#allocation7 + $0x558] sm:$0xff]
        %v1165 = vld [vmem:[#allocation7 + $0x560] sm:$0xff]
        %v1166 = vld [vmem:[#allocation7 + $0x568] sm:$0xff]
        %v1167 = vld [vmem:[#allocation7 + $0x570] sm:$0xff]
        %v1168 = vld [vmem:[#allocation7 + $0x578] sm:$0xff]
        %v1169 = vld [vmem:[#allocation7 + $0x580] sm:$0xff]
        %v1170 = vld [vmem:[#allocation7 + $0x588] sm:$0xff]
        %v1171 = vld [vmem:[#allocation7 + $0x590] sm:$0xff]
        %v1172 = vld [vmem:[#allocation7 + $0x598] sm:$0xff]
        %v1173 = vld [vmem:[#allocation7 + $0x5a0] sm:$0xff]
        %v1174 = vld [vmem:[#allocation7 + $0x5a8] sm:$0xff]
        %v1175 = vld [vmem:[#allocation7 + $0x5b0] sm:$0xff]
        %v1176 = vld [vmem:[#allocation7 + $0x5b8] sm:$0xff]
        %v1177 = vld [vmem:[#allocation7 + $0x5c0] sm:$0xff]
        %v1178 = vld [vmem:[#allocation7 + $0x5c8] sm:$0xff]
        %v1179 = vld [vmem:[#allocation7 + $0x5d0] sm:$0xff]
        %v1180 = vld [vmem:[#allocation7 + $0x5d8] sm:$0xff]
        %v1181 = vld [vmem:[#allocation7 + $0x5e0] sm:$0xff]
        %v1182 = vld [vmem:[#allocation7 + $0x5e8] sm:$0xff]
        %v1183 = vld [vmem:[#allocation7 + $0x5f0] sm:$0xff]
        %v1184 = vld [vmem:[#allocation7 + $0x5f8] sm:$0xff]
        %v1185 = vld [vmem:[%s6] sm:$0x3]
        %v1190 = vrot.slane %v989, 7
        %v1191 = vrot.slane %v990, 7
        %v1192 = vrot.slane %v991, 7
        %v1193 = vsel %vm426, %v1190, %v1192
        %v1194 = vrot.slane %v992, 7
        %v1195 = vsel %vm426, %v1191, %v1194
        %v1202 = vsel %vm426, 0.0, %v1190
        %v1203 = vsel %vm426, 0.0, %v1191
        %v1204 = vsel %vm426, %v1192, 0.0
        %v1205 = vsel %vm426, %v1194, 0.0
        %v1210 = vrot.slane %v1202, 1
        %v1211 = vrot.slane %v1193, 1
        %v1212 = vsel %vm355, %v1210, %v1211
        %v1213 = vrot.slane %v1203, 1
        %v1214 = vrot.slane %v1195, 1
        %v1215 = vsel %vm355, %v1213, %v1214
        %v1216 = vrot.slane %v1204, 1
        %v1217 = vsel %vm355, %v1211, %v1216
        %v1218 = vrot.slane %v1205, 1
        %v1219 = vsel %vm355, %v1214, %v1218
        %v1224 = vrot.slane %v1202, 2
        %v1225 = vrot.slane %v1193, 2
        %v1226 = vsel %vm367, %v1224, %v1225
        %v1227 = vrot.slane %v1203, 2
        %v1228 = vrot.slane %v1195, 2
        %v1229 = vsel %vm367, %v1227, %v1228
        %v1230 = vrot.slane %v1204, 2
        %v1231 = vsel %vm367, %v1225, %v1230
        %v1232 = vrot.slane %v1205, 2
        %v1233 = vsel %vm367, %v1228, %v1232
        %v1239 = vlaneseq
        %v1240 = vshrl.u32 %v1239, 7
        %v1241 = vsub.s32 0, %v1240
        %v1242 = vrot.slane %v1185, %v1241
        %v1243 = vlaneseq
        %v1244 = vshrl.u32 %v1243, 7
        %v1245 = vsub.s32 1, %v1244
        %v1246 = vrot.slane %v1185, %v1245
        %1249 = vmatprep.subr.mxu0 %v994
        %1250 = vmatpush1.msra.mxu0 %v993
        %1251 = vmatprep.subr.mxu0 %v996
        %1252 = vmatpush1.msra.mxu0 %v995
        %1253 = vmatprep.subr.mxu0 %v998
        %1254 = vmatpush1.msra.mxu0 %v997
        %1255 = vmatprep.subr.mxu0 %v1000
        %1256 = vmatpush1.msra.mxu0 %v999
        %1257 = vmatprep.subr.mxu0 %v1002
        %1258 = vmatpush1.msra.mxu0 %v1001
        %1259 = vmatprep.subr.mxu0 %v1004
        %1260 = vmatpush1.msra.mxu0 %v1003
        %1261 = vmatprep.subr.mxu0 %v1006
        %1262 = vmatpush1.msra.mxu0 %v1005
        %1263 = vmatprep.subr.mxu0 %v1008
        %1264 = vmatpush1.msra.mxu0 %v1007
        %1265 = vmatprep.subr.mxu0 %v1010
        %1266 = vmatpush1.msra.mxu0 %v1009
        %1267 = vmatprep.subr.mxu0 %v1012
        %1268 = vmatpush1.msra.mxu0 %v1011
        %1269 = vmatprep.subr.mxu0 %v1014
        %1270 = vmatpush1.msra.mxu0 %v1013
        %1271 = vmatprep.subr.mxu0 %v1016
        %1272 = vmatpush1.msra.mxu0 %v1015
        %1273 = vmatprep.subr.mxu0 %v1018
        %1274 = vmatpush1.msra.mxu0 %v1017
        %1275 = vmatprep.subr.mxu0 %v1020
        %1276 = vmatpush1.msra.mxu0 %v1019
        %1277 = vmatprep.subr.mxu0 %v1022
        %1278 = vmatpush1.msra.mxu0 %v1021
        %1279 = vmatprep.subr.mxu0 %v1024
        %1280 = vmatpush1.msra.mxu0 %v1023
        %1281 = vmatprep.subr.mxu0 %v1026
        %1282 = vmatpush1.msra.mxu0 %v1025
        %1283 = vmatprep.subr.mxu0 %v1028
        %1284 = vmatpush1.msra.mxu0 %v1027
        %1285 = vmatprep.subr.mxu0 %v1030
        %1286 = vmatpush1.msra.mxu0 %v1029
        %1287 = vmatprep.subr.mxu0 %v1032
        %1288 = vmatpush1.msra.mxu0 %v1031
        %1289 = vmatprep.subr.mxu0 %v1034
        %1290 = vmatpush1.msra.mxu0 %v1033
        %1291 = vmatprep.subr.mxu0 %v1036
        %1292 = vmatpush1.msra.mxu0 %v1035
        %1293 = vmatprep.subr.mxu0 %v1038
        %1294 = vmatpush1.msra.mxu0 %v1037
        %1295 = vmatprep.subr.mxu0 %v1040
        %1296 = vmatpush1.msra.mxu0 %v1039
        %1297 = vmatprep.subr.mxu0 %v1042
        %1298 = vmatpush1.msra.mxu0 %v1041
        %1299 = vmatprep.subr.mxu0 %v1044
        %1300 = vmatpush1.msra.mxu0 %v1043
        %1301 = vmatprep.subr.mxu0 %v1046
        %1302 = vmatpush1.msra.mxu0 %v1045
        %1303 = vmatprep.subr.mxu0 %v1048
        %1304 = vmatpush1.msra.mxu0 %v1047
        %1305 = vmatprep.subr.mxu0 %v1050
        %1306 = vmatpush1.msra.mxu0 %v1049
        %1307 = vmatprep.subr.mxu0 %v1052
        %1308 = vmatpush1.msra.mxu0 %v1051
        %1309 = vmatprep.subr.mxu0 %v1054
        %1310 = vmatpush1.msra.mxu0 %v1053
        %1311 = vmatprep.subr.mxu0 %v1056
        %1312 = vmatpush1.msra.mxu0 %v1055
        %1313 = vmatprep.mubr.f32.mxu0 %v1203
        %1314 = vmatmul.mubr.f32.gmra.mrb[0].mxu0 %v1202
        %v1315 = vpop.f32.mrb[0].mxu0
        %v1316 = vadd.f32 %v1242, %v1315
        %v1317 = vpop.f32.mrb[0].mxu0
        %v1318 = vadd.f32 %v1246, %v1317
        %1319 = vmatprep.mubr.f32.mxu0 %v1195
        %1320 = vmatmul.mubr.f32.gmra.mrb[0].mxu0 %v1193
        %v1321 = vpop.f32.mrb[0].mxu0
        %v1322 = vadd.f32 %v1242, %v1321
        %v1323 = vpop.f32.mrb[0].mxu0
        %v1324 = vadd.f32 %v1246, %v1323
        %1325 = vdwg.mxu0
        %1326 = vmatprep.subr.mxu0 %v1058
        %1327 = vmatpush1.msra.mxu0 %v1057
        %1328 = vmatprep.subr.mxu0 %v1060
        %1329 = vmatpush1.msra.mxu0 %v1059
        %1330 = vmatprep.subr.mxu0 %v1062
        %1331 = vmatpush1.msra.mxu0 %v1061
        %1332 = vmatprep.subr.mxu0 %v1064
        %1333 = vmatpush1.msra.mxu0 %v1063
        %1334 = vmatprep.subr.mxu0 %v1066
        %1335 = vmatpush1.msra.mxu0 %v1065
        %1336 = vmatprep.subr.mxu0 %v1068
        %1337 = vmatpush1.msra.mxu0 %v1067
        %1338 = vmatprep.subr.mxu0 %v1070
        %1339 = vmatpush1.msra.mxu0 %v1069
        %1340 = vmatprep.subr.mxu0 %v1072
        %1341 = vmatpush1.msra.mxu0 %v1071
        %1342 = vmatprep.subr.mxu0 %v1074
        %1343 = vmatpush1.msra.mxu0 %v1073
        %1344 = vmatprep.subr.mxu0 %v1076
        %1345 = vmatpush1.msra.mxu0 %v1075
        %1346 = vmatprep.subr.mxu0 %v1078
        %1347 = vmatpush1.msra.mxu0 %v1077
        %1348 = vmatprep.subr.mxu0 %v1080
        %1349 = vmatpush1.msra.mxu0 %v1079
        %1350 = vmatprep.subr.mxu0 %v1082
        %1351 = vmatpush1.msra.mxu0 %v1081
        %1352 = vmatprep.subr.mxu0 %v1084
        %1353 = vmatpush1.msra.mxu0 %v1083
        %1354 = vmatprep.subr.mxu0 %v1086
        %1355 = vmatpush1.msra.mxu0 %v1085
        %1356 = vmatprep.subr.mxu0 %v1088
        %1357 = vmatpush1.msra.mxu0 %v1087
        %1358 = vmatprep.subr.mxu0 %v1090
        %1359 = vmatpush1.msra.mxu0 %v1089
        %1360 = vmatprep.subr.mxu0 %v1092
        %1361 = vmatpush1.msra.mxu0 %v1091
        %1362 = vmatprep.subr.mxu0 %v1094
        %1363 = vmatpush1.msra.mxu0 %v1093
        %1364 = vmatprep.subr.mxu0 %v1096
        %1365 = vmatpush1.msra.mxu0 %v1095
        %1366 = vmatprep.subr.mxu0 %v1098
        %1367 = vmatpush1.msra.mxu0 %v1097
        %1368 = vmatprep.subr.mxu0 %v1100
        %1369 = vmatpush1.msra.mxu0 %v1099
        %1370 = vmatprep.subr.mxu0 %v1102
        %1371 = vmatpush1.msra.mxu0 %v1101
        %1372 = vmatprep.subr.mxu0 %v1104
        %1373 = vmatpush1.msra.mxu0 %v1103
        %1374 = vmatprep.subr.mxu0 %v1106
        %1375 = vmatpush1.msra.mxu0 %v1105
        %1376 = vmatprep.subr.mxu0 %v1108
        %1377 = vmatpush1.msra.mxu0 %v1107
        %1378 = vmatprep.subr.mxu0 %v1110
        %1379 = vmatpush1.msra.mxu0 %v1109
        %1380 = vmatprep.subr.mxu0 %v1112
        %1381 = vmatpush1.msra.mxu0 %v1111
        %1382 = vmatprep.subr.mxu0 %v1114
        %1383 = vmatpush1.msra.mxu0 %v1113
        %1384 = vmatprep.subr.mxu0 %v1116
        %1385 = vmatpush1.msra.mxu0 %v1115
        %1386 = vmatprep.subr.mxu0 %v1118
        %1387 = vmatpush1.msra.mxu0 %v1117
        %1388 = vmatprep.subr.mxu0 %v1120
        %1389 = vmatpush1.msra.mxu0 %v1119
        %1390 = vmatprep.mubr.f32.mxu0 %v1215
        %1391 = vmatmul.mubr.f32.gmra.mrb[0].mxu0 %v1212
        %v1392 = vpop.f32.mrb[0].mxu0
        %v1393 = vadd.f32 %v1316, %v1392
        %v1394 = vpop.f32.mrb[0].mxu0
        %v1395 = vadd.f32 %v1318, %v1394
        %1396 = vmatprep.mubr.f32.mxu0 %v1219
        %1397 = vmatmul.mubr.f32.gmra.mrb[0].mxu0 %v1217
        %v1398 = vpop.f32.mrb[0].mxu0
        %v1399 = vadd.f32 %v1322, %v1398
        %v1400 = vpop.f32.mrb[0].mxu0
        %v1401 = vadd.f32 %v1324, %v1400
        %1402 = vdwg.mxu0
        %1403 = vmatprep.subr.mxu0 %v1122
        %1404 = vmatpush1.msra.mxu0 %v1121
        %1405 = vmatprep.subr.mxu0 %v1124
        %1406 = vmatpush1.msra.mxu0 %v1123
        %1407 = vmatprep.subr.mxu0 %v1126
        %1408 = vmatpush1.msra.mxu0 %v1125
        %1409 = vmatprep.subr.mxu0 %v1128
        %1410 = vmatpush1.msra.mxu0 %v1127
        %1411 = vmatprep.subr.mxu0 %v1130
        %1412 = vmatpush1.msra.mxu0 %v1129
        %1413 = vmatprep.subr.mxu0 %v1132
        %1414 = vmatpush1.msra.mxu0 %v1131
        %1415 = vmatprep.subr.mxu0 %v1134
        %1416 = vmatpush1.msra.mxu0 %v1133
        %1417 = vmatprep.subr.mxu0 %v1136
        %1418 = vmatpush1.msra.mxu0 %v1135
        %1419 = vmatprep.subr.mxu0 %v1138
        %1420 = vmatpush1.msra.mxu0 %v1137
        %1421 = vmatprep.subr.mxu0 %v1140
        %1422 = vmatpush1.msra.mxu0 %v1139
        %1423 = vmatprep.subr.mxu0 %v1142
        %1424 = vmatpush1.msra.mxu0 %v1141
        %1425 = vmatprep.subr.mxu0 %v1144
        %1426 = vmatpush1.msra.mxu0 %v1143
        %1427 = vmatprep.subr.mxu0 %v1146
        %1428 = vmatpush1.msra.mxu0 %v1145
        %1429 = vmatprep.subr.mxu0 %v1148
        %1430 = vmatpush1.msra.mxu0 %v1147
        %1431 = vmatprep.subr.mxu0 %v1150
        %1432 = vmatpush1.msra.mxu0 %v1149
        %1433 = vmatprep.subr.mxu0 %v1152
        %1434 = vmatpush1.msra.mxu0 %v1151
        %1435 = vmatprep.subr.mxu0 %v1154
        %1436 = vmatpush1.msra.mxu0 %v1153
        %1437 = vmatprep.subr.mxu0 %v1156
        %1438 = vmatpush1.msra.mxu0 %v1155
        %1439 = vmatprep.subr.mxu0 %v1158
        %1440 = vmatpush1.msra.mxu0 %v1157
        %1441 = vmatprep.subr.mxu0 %v1160
        %1442 = vmatpush1.msra.mxu0 %v1159
        %1443 = vmatprep.subr.mxu0 %v1162
        %1444 = vmatpush1.msra.mxu0 %v1161
        %1445 = vmatprep.subr.mxu0 %v1164
        %1446 = vmatpush1.msra.mxu0 %v1163
        %1447 = vmatprep.subr.mxu0 %v1166
        %1448 = vmatpush1.msra.mxu0 %v1165
        %1449 = vmatprep.subr.mxu0 %v1168
        %1450 = vmatpush1.msra.mxu0 %v1167
        %1451 = vmatprep.subr.mxu0 %v1170
        %1452 = vmatpush1.msra.mxu0 %v1169
        %1453 = vmatprep.subr.mxu0 %v1172
        %1454 = vmatpush1.msra.mxu0 %v1171
        %1455 = vmatprep.subr.mxu0 %v1174
        %1456 = vmatpush1.msra.mxu0 %v1173
        %1457 = vmatprep.subr.mxu0 %v1176
        %1458 = vmatpush1.msra.mxu0 %v1175
        %1459 = vmatprep.subr.mxu0 %v1178
        %1460 = vmatpush1.msra.mxu0 %v1177
        %1461 = vmatprep.subr.mxu0 %v1180
        %1462 = vmatpush1.msra.mxu0 %v1179
        %1463 = vmatprep.subr.mxu0 %v1182
        %1464 = vmatpush1.msra.mxu0 %v1181
        %1465 = vmatprep.subr.mxu0 %v1184
        %1466 = vmatpush1.msra.mxu0 %v1183
        %1467 = vmatprep.mubr.f32.mxu0 %v1229
        %1468 = vmatmul.mubr.f32.gmra.mrb[0].mxu0 %v1226
        %v1469 = vpop.f32.mrb[0].mxu0
        %v1470 = vadd.f32 %v1393, %v1469
        %v1471 = vpop.f32.mrb[0].mxu0
        %v1472 = vadd.f32 %v1395, %v1471
        %1473 = vmatprep.mubr.f32.mxu0 %v1233
        %1474 = vmatmul.mubr.f32.gmra.mrb[0].mxu0 %v1231
        %v1475 = vpop.f32.mrb[0].mxu0
        %v1476 = vadd.f32 %v1399, %v1475
        %v1477 = vpop.f32.mrb[0].mxu0
        %v1478 = vadd.f32 %v1401, %v1477
        %1479 = vdwg.mxu0
        %v1480 = vmax.f32 %v1470, 0.0
        %v1481 = vmax.f32 %v1472, 0.0
        %v1482 = vmax.f32 %v1476, 0.0
        %v1483 = vmax.f32 %v1478, 0.0
        %1484 = vst [vmem:[%s315] sm:$0xff] %v1480
        %1485 = vst [vmem:[%s315 + $0x8] sm:$0xff] %v1481
        %1486 = vst [vmem:[%s315 + $0x10] sm:$0xff] %v1482
        %1487 = vst [vmem:[%s315 + $0x18] sm:$0xff] %v1483
        %s1488 = sand.u32 %s183, 1
        %s1489 = scalar_lea.sflag [#allocation4], %s1488
        %s1490 = sand.u32 %s183, 1
        %s1491 = smul.addr %s1490, 32
        %s1492 = scalar_lea.vmem [#allocation8], %s1491
        // Predicated region
        $region61: #{fcn_forward.1} parent=47 // pred_check
          %p1493 = pneg %p193
        $region62: #{fcn_forward.1} parent=47 // pred_check_branch
          %1495 = sbr.rel (%p1493) target = $region64
        $region63: #{fcn_forward.1} parent=47 // pred_region
          %s1497 = ssub.s32 512, 512
          %1498 = vsyncadd %s1489, %s1497
          %s1499 = smul.addr %s23, 4
          %s1500 = smul.addr %s1499, 128
          %s1501 = scalar_lea.hbm %s7, %s1500
          %s1502 = sshll.u32 %s1492, 4
          %s1503 = int_to_ptr.vmem [resolvable:$true] %s1502
          %1508 = dma.vmem_to_hbm [thread:$0]  %s1503, 512, %s1501, %s1489, 256, 256, 16
        $region64: #{fcn_forward.1} parent=47 // pred_fallthru
          _
      $region48: #{fcn_forward.1} parent=5 // pred_fallthru
        _
      %p1509 = scmp.le.s32.totalorder 2, %s18
      // Predicated region
      $region65: #{fcn_forward.1} parent=5 // pred_check
        %p1510 = pneg %p1509
      $region66: #{fcn_forward.1} parent=5 // pred_check_branch
        %1512 = sbr.rel (%p1510) target = $region68
      $region67: #{fcn_forward.1} parent=5 // pred_region
        %s1513 = ssub.s32 %s18, 2
        // Predicated region
        $region69: #{fcn_forward.1} parent=67 // pred_check
          %p1514 = pneg %p199
        $region70: #{fcn_forward.1} parent=67 // pred_check_branch
          %1516 = sbr.rel (%p1514) target = $region72
        $region71: #{fcn_forward.1} parent=67 // pred_region
          %s1517 = sand.u32 %s184, 1
          %s1518 = scalar_lea.sflag [#allocation4], %s1517
          %s1519 = sand.u32 %s184, 1
          %s1520 = smul.addr %s1519, 32
          %s1521 = scalar_lea.vmem [#allocation8], %s1520
          %1522 = dma.done %s1518, 512
        $region72: #{fcn_forward.1} parent=67 // pred_fallthru
          _
      $region68: #{fcn_forward.1} parent=5 // pred_fallthru
        _
    $region6: #{fcn_forward.1} parent=1 // loop_footer
      %s22 = sadd.s32 1, %s18
    $region7: #{fcn_forward.1} parent=1 // loop_footer_branch
      %17 = sbr.rel target = $region3
    $region8: #{fcn_forward.1} parent=1 // loop_exit
      _
    %1523 = vsyncpa [#allocation3], 1
    %s1524 = scalar_lea.sflag [#allocation3], 1
    %1525 = vsyncpa %s1524, 1
    %1526 = vsyncpa [#allocation6], 1
    %1527 = vsyncpa [#allocation4], 1
    %s1528 = scalar_lea.sflag [#allocation4], 1
    %1529 = vsyncpa %s1528, 1

</llo_original>
